<compile_context>
chip_gen: v7x
topology: tpu7x:2x2x1
jax: 0.10.0
libtpu: 0.0.40
codegen_flags: <defaults>
</compile_context>

<pallas_src>
import math
from functools import partial

import jax
import jax.numpy as jnp
from jax.experimental import pallas as pl
from jax.experimental.pallas import tpu as pltpu


def _mha_kernel(x_ref, wqkv_ref, bqkv_ref, wo_ref, bo_ref, o_ref,
                *, num_heads: int, seq_len: int, batch_block: int):
    """One grid step: `rows = batch_block * seq_len` flattened rows of (rows, D)."""
    rows = o_ref.shape[0]
    x = x_ref[...]                                            # (rows, D)

    # Additive block-diagonal causal bias, built once per grid step (outside the
    # head loop) from iotas: 0 where attention is allowed, -1e6 (the module's
    # constant) elsewhere.  exp(s - 1e6 - m) underflows to exactly 0 in f32, so
    # adding the bias is equivalent to the module's where(mask, s, -1e6).
    q_idx = jax.lax.broadcasted_iota(jnp.int32, (rows, rows), 0)
    k_idx = jax.lax.broadcasted_iota(jnp.int32, (rows, rows), 1)
    if batch_block == 1:
        allowed = q_idx >= k_idx                              # plain causal
    else:
        # block-diagonal: same batch element AND causal within the sequence
        same_batch = (q_idx // seq_len) == (k_idx // seq_len)
        allowed = jnp.logical_and(same_batch, q_idx >= k_idx)
    mask_bias = jnp.where(allowed, jnp.float32(0.0), jnp.float32(-1000000.0))

    # Accumulator initialized with the output-projection bias (hoisted broadcast).
    acc = jnp.broadcast_to(bo_ref[...].astype(jnp.float32), o_ref.shape)  # (rows, D)

    # num_heads is small & static -> unrolled; every slice below is a leading-dim
    # ref index (no lane slicing).  1/sqrt(head_size) is already folded into the
    # Q weights/bias by the wrapper.
    for h in range(num_heads):
        qh = jnp.dot(x, wqkv_ref[3 * h + 0],
                     preferred_element_type=jnp.float32) + bqkv_ref[3 * h + 0]   # (rows, hs)
        kh = jnp.dot(x, wqkv_ref[3 * h + 1],
                     preferred_element_type=jnp.float32) + bqkv_ref[3 * h + 1]   # (rows, hs)
        vh = jnp.dot(x, wqkv_ref[3 * h + 2],
                     preferred_element_type=jnp.float32) + bqkv_ref[3 * h + 2]   # (rows, hs)

        # A @ B^T on the MXU (contract last axes directly), then additive mask.
        scores = jax.lax.dot_general(
            qh, kh, (((1,), (1,)), ((), ())),
            preferred_element_type=jnp.float32) + mask_bias                      # (rows, rows)

        # Exact softmax (exp on EUP; exact divide -> matches the module closely).
        m = jnp.max(scores, axis=-1, keepdims=True)
        e = jnp.exp(scores - m)
        probs = e / jnp.sum(e, axis=-1, keepdims=True)

        vals = jnp.dot(probs, vh, preferred_element_type=jnp.float32)            # (rows, hs)

        # Per-head output projection: wo_ref[h] is a clean leading-dim slice of
        # (H, hs, D); accumulating removes any lane concatenation.
        acc = acc + jnp.dot(vals, wo_ref[h], preferred_element_type=jnp.float32)

    o_ref[...] = acc.astype(o_ref.dtype)


def multihead_masked_attention_pallas(x, w_qkv, b_qkv, w_o, b_o,
                                      *, num_heads, head_size, batch_block=None):
    """x: (B, S, D); w_qkv: (D, 3*H*hs); b_qkv: (1, 3*H*hs); w_o: (H*hs, D); b_o: (1, D).

    batch_block: batch elements per grid step.  Default B//2 (when B is even) so
    the 'parallel' grid axis can be sharded over both TensorCores on v7x.
    """
    B, S, D = x.shape
    hhs = num_heads * head_size
    qkv_out = 3 * hhs
    assert w_qkv.shape == (D, qkv_out) and w_o.shape == (hhs, D)
    assert b_qkv.shape == (1, qkv_out) and b_o.shape == (1, D)

    if batch_block is None:
        batch_block = B // 2 if (B >= 2 and B % 2 == 0) else B
    assert B % batch_block == 0
    rows = batch_block * S                      # rows handled per grid step
    assert rows % 8 == 0, "batch_block * seq must be a multiple of 8 (sublane constraint)"

    # ---- Host-side layout plumbing (free) --------------------------------------
    # Flatten rows so the kernel works on lane-dense 2-D slabs.
    x2 = x.reshape(B * S, D)

    # Repack W_QKV / b_QKV into per-(head, q/k/v) slabs and fold 1/sqrt(head_size)
    # into the Q part.  Column c = qkv_idx*(H*hs) + h*hs + d  ->  (qkv_idx, h, d).
    scale = 1.0 / math.sqrt(head_size)
    qkv_scale = jnp.array([scale, 1.0, 1.0], jnp.float32)[None, :, None, None]
    w4 = jnp.transpose(w_qkv.reshape(D, 3, num_heads, head_size), (2, 1, 0, 3))  # (H,3,D,hs)
    b4 = jnp.transpose(b_qkv.reshape(1, 3, num_heads, head_size), (2, 1, 0, 3))  # (H,3,1,hs)
    w_qkv_ph = (w4 * qkv_scale).reshape(num_heads * 3, D, head_size)             # (3H,D,hs)
    b_qkv_ph = (b4 * qkv_scale).reshape(num_heads * 3, 1, head_size)             # (3H,1,hs)

    # W_O per head so the kernel slices only leading dims.
    w_o3 = w_o.reshape(num_heads, head_size, D)                                  # (H,hs,D)
    # -----------------------------------------------------------------------------

    kernel = partial(_mha_kernel, num_heads=num_heads, seq_len=S,
                     batch_block=batch_block)

    out = pl.pallas_call(
        kernel,
        out_shape=jax.ShapeDtypeStruct((B * S, D), x.dtype),
        grid_spec=pltpu.PrefetchScalarGridSpec(
            num_scalar_prefetch=0,
            grid=(B // batch_block,),
            in_specs=[
                pl.BlockSpec((rows, D), lambda g: (g, 0)),                    # x rows
                pl.BlockSpec((num_heads * 3, D, head_size),
                             lambda g: (0, 0, 0)),                            # W_QKV per (head,q/k/v)
                pl.BlockSpec((num_heads * 3, 1, head_size),
                             lambda g: (0, 0, 0)),                            # b_QKV per (head,q/k/v)
                pl.BlockSpec((num_heads, head_size, D), lambda g: (0, 0, 0)), # W_O per head
                pl.BlockSpec((1, D), lambda g: (0, 0)),                       # b_O
            ],
            out_specs=pl.BlockSpec((rows, D), lambda g: (g, 0)),              # lane-dense 2-D output
        ),
        compiler_params=pltpu.CompilerParams(dimension_semantics=("parallel",)),
    )(x2, w_qkv_ph, b_qkv_ph, w_o3, b_o)

    # For real sequence lengths this should become a KV-tiled online-softmax
    # (flash) kernel with >=128-lane score/output tiles (see header notes).
    return out.reshape(B, S, D)


def reference_jax(x, w_qkv, b_qkv, w_o, b_o, num_heads, head_size):
    B, S, D = x.shape
    hhs = num_heads * head_size
    qkv = x @ w_qkv + b_qkv[0]
    q, k, v = qkv[..., :hhs], qkv[..., hhs:2 * hhs], qkv[..., 2 * hhs:]
    q = q.reshape(B, S, num_heads, head_size)
    k = k.reshape(B, S, num_heads, head_size)
    v = v.reshape(B, S, num_heads, head_size)
    scores = jnp.einsum('bqhd,bkhd->bhqk', q, k) / math.sqrt(head_size)
    mask = jnp.arange(S)[:, None] >= jnp.arange(S)[None, :]
    scores = jnp.where(mask[None, None], scores, jnp.float32(-1000000.0))
    probs = jax.nn.softmax(scores, axis=-1)
    vals = jnp.einsum('bhqk,bkhd->bqhd', probs, v).reshape(B, S, hhs)
    return vals @ w_o + b_o[0]


if __name__ == "__main__":
    # module config (hidden_size=32, num_heads=4 -> head_size=8), small batch/seq
    hidden_size = 32
    num_heads = 4
    head_size = hidden_size // num_heads
    batch, seq = 2, 8

    key = jax.random.PRNGKey(0)
    kx, kw1, kb1, kw2, kb2 = jax.random.split(key, 5)

    x = jax.random.normal(kx, (batch, seq, hidden_size), dtype=jnp.float32)

    # deterministic parameter init (Kaiming-uniform-ish bounds, like nn.Linear),
    # stored pre-transposed as (in_features, out_features)
    qkv_out = 3 * num_heads * head_size
    bound1 = 1.0 / math.sqrt(hidden_size)
    bound2 = 1.0 / math.sqrt(num_heads * head_size)
    w_qkv = jax.random.uniform(kw1, (hidden_size, qkv_out), jnp.float32, -bound1, bound1)
    b_qkv = jax.random.uniform(kb1, (1, qkv_out), jnp.float32, -bound1, bound1)
    w_o = jax.random.uniform(kw2, (num_heads * head_size, hidden_size), jnp.float32, -bound2, bound2)
    b_o = jax.random.uniform(kb2, (1, hidden_size), jnp.float32, -bound2, bound2)

    out = multihead_masked_attention_pallas(
        x, w_qkv, b_qkv, w_o, b_o, num_heads=num_heads, head_size=head_size)
    out = jax.block_until_ready(out)

    ref = reference_jax(x, w_qkv, b_qkv, w_o, b_o, num_heads, head_size)
    assert out.shape == (batch, seq, hidden_size)
    # exact softmax (no approx reciprocal) -> error is ~1e-6; tolerance has margin
    assert jnp.allclose(out, ref, atol=1e-3, rtol=1e-3), float(jnp.abs(out - ref).max())

    print("KERNEL_OK")
</pallas_src>

<mosaic_0001>
module attributes {stable_mosaic.version = 11 : i64} {
  func.func @_mha_kernel(%arg0: i32, %arg1: memref<8x32xf32, #tpu.memory_space<vmem>>, %arg2: memref<12x32x8xf32, #tpu.memory_space<vmem>>, %arg3: memref<12x1x8xf32, #tpu.memory_space<vmem>>, %arg4: memref<4x8x32xf32, #tpu.memory_space<vmem>>, %arg5: memref<1x32xf32, #tpu.memory_space<vmem>>, %arg6: memref<8x32xf32, #tpu.memory_space<vmem>>) attributes {dimension_semantics = [#tpu.dimension_semantics<parallel>], iteration_bounds = array<i64: 2>, scalar_prefetch = 0 : i64, scratch_operands = 0 : i64, tpu.core_type = #tpu.core_type<tc>, window_params = [{transform_indices = @transform_0, window_bounds = array<i64: 8, 32>}, {pipeline_mode = #tpu.pipeline_mode<synchronous>, transform_indices = @transform_1, window_bounds = array<i64: 12, 32, 8>}, {pipeline_mode = #tpu.pipeline_mode<synchronous>, transform_indices = @transform_2, window_bounds = array<i64: 12, 1, 8>}, {pipeline_mode = #tpu.pipeline_mode<synchronous>, transform_indices = @transform_3, window_bounds = array<i64: 4, 8, 32>}, {pipeline_mode = #tpu.pipeline_mode<synchronous>, transform_indices = @transform_4, window_bounds = array<i64: 1, 32>}, {transform_indices = @transform_5, window_bounds = array<i64: 8, 32>}]} {
    %c0 = arith.constant 0 : index
    %c0_0 = arith.constant 0 : index
    %0 = vector.load %arg1[%c0, %c0_0] : memref<8x32xf32, #tpu.memory_space<vmem>>, vector<8x32xf32>
    %1 = tpu.iota {dimensions = array<i32: 0>} : vector<8x8xi32>
    %2 = tpu.iota {dimensions = array<i32: 1>} : vector<8x8xi32>
    %3 = arith.cmpi sge, %1, %2 : vector<8x8xi32>
    %cst = arith.constant 0.000000e+00 : f32
    %cst_1 = arith.constant -1.000000e+06 : f32
    %4 = vector.broadcast %cst : f32 to vector<8x8xf32>
    %5 = vector.broadcast %cst_1 : f32 to vector<8x8xf32>
    %6 = arith.select %3, %4, %5 : vector<8x8xi1>, vector<8x8xf32>
    %c0_2 = arith.constant 0 : index
    %c0_3 = arith.constant 0 : index
    %7 = vector.load %arg5[%c0_2, %c0_3] : memref<1x32xf32, #tpu.memory_space<vmem>>, vector<1x32xf32>
    %8 = vector.shape_cast %7 : vector<1x32xf32> to vector<1x32xf32>
    %9 = vector.broadcast %8 : vector<1x32xf32> to vector<8x32xf32>
    %c0_4 = arith.constant 0 : index
    %c0_5 = arith.constant 0 : index
    %c0_6 = arith.constant 0 : index
    %10 = vector.load %arg2[%c0_4, %c0_5, %c0_6] : memref<12x32x8xf32, #tpu.memory_space<vmem>>, vector<1x32x8xf32>
    %11 = vector.shape_cast %10 : vector<1x32x8xf32> to vector<32x8xf32>
    %cst_7 = arith.constant dense<0.000000e+00> : vector<8x8xf32>
    %12 = tpu.matmul %0, %11, %cst_7 {dimension_numbers = #tpu.dot_dimension_numbers<[1], [0], [0], [1], [0, 0, 1, 1], [], []>} : vector<8x32xf32>, vector<32x8xf32>, vector<8x8xf32> -> vector<8x8xf32>
    %c0_8 = arith.constant 0 : index
    %c0_9 = arith.constant 0 : index
    %c0_10 = arith.constant 0 : index
    %13 = vector.load %arg3[%c0_8, %c0_9, %c0_10] : memref<12x1x8xf32, #tpu.memory_space<vmem>>, vector<1x1x8xf32>
    %14 = vector.shape_cast %13 : vector<1x1x8xf32> to vector<1x8xf32>
    %15 = vector.broadcast %14 : vector<1x8xf32> to vector<8x8xf32>
    %16 = arith.addf %12, %15 : vector<8x8xf32>
    %c1 = arith.constant 1 : index
    %c0_11 = arith.constant 0 : index
    %c0_12 = arith.constant 0 : index
    %17 = vector.load %arg2[%c1, %c0_11, %c0_12] : memref<12x32x8xf32, #tpu.memory_space<vmem>>, vector<1x32x8xf32>
    %18 = vector.shape_cast %17 : vector<1x32x8xf32> to vector<32x8xf32>
    %cst_13 = arith.constant dense<0.000000e+00> : vector<8x8xf32>
    %19 = tpu.matmul %0, %18, %cst_13 {dimension_numbers = #tpu.dot_dimension_numbers<[1], [0], [0], [1], [0, 0, 1, 1], [], []>} : vector<8x32xf32>, vector<32x8xf32>, vector<8x8xf32> -> vector<8x8xf32>
    %c1_14 = arith.constant 1 : index
    %c0_15 = arith.constant 0 : index
    %c0_16 = arith.constant 0 : index
    %20 = vector.load %arg3[%c1_14, %c0_15, %c0_16] : memref<12x1x8xf32, #tpu.memory_space<vmem>>, vector<1x1x8xf32>
    %21 = vector.shape_cast %20 : vector<1x1x8xf32> to vector<1x8xf32>
    %22 = vector.broadcast %21 : vector<1x8xf32> to vector<8x8xf32>
    %23 = arith.addf %19, %22 : vector<8x8xf32>
    %c2 = arith.constant 2 : index
    %c0_17 = arith.constant 0 : index
    %c0_18 = arith.constant 0 : index
    %24 = vector.load %arg2[%c2, %c0_17, %c0_18] : memref<12x32x8xf32, #tpu.memory_space<vmem>>, vector<1x32x8xf32>
    %25 = vector.shape_cast %24 : vector<1x32x8xf32> to vector<32x8xf32>
    %cst_19 = arith.constant dense<0.000000e+00> : vector<8x8xf32>
    %26 = tpu.matmul %0, %25, %cst_19 {dimension_numbers = #tpu.dot_dimension_numbers<[1], [0], [0], [1], [0, 0, 1, 1], [], []>} : vector<8x32xf32>, vector<32x8xf32>, vector<8x8xf32> -> vector<8x8xf32>
    %c2_20 = arith.constant 2 : index
    %c0_21 = arith.constant 0 : index
    %c0_22 = arith.constant 0 : index
    %27 = vector.load %arg3[%c2_20, %c0_21, %c0_22] : memref<12x1x8xf32, #tpu.memory_space<vmem>>, vector<1x1x8xf32>
    %28 = vector.shape_cast %27 : vector<1x1x8xf32> to vector<1x8xf32>
    %29 = vector.broadcast %28 : vector<1x8xf32> to vector<8x8xf32>
    %30 = arith.addf %26, %29 : vector<8x8xf32>
    %cst_23 = arith.constant dense<0.000000e+00> : vector<8x8xf32>
    %31 = tpu.matmul %16, %23, %cst_23 {dimension_numbers = #tpu.dot_dimension_numbers<[1], [1], [0], [0], [0, 0, 1, 0], [], []>} : vector<8x8xf32>, vector<8x8xf32>, vector<8x8xf32> -> vector<8x8xf32>
    %32 = arith.addf %31, %6 : vector<8x8xf32>
    %cst_24 = arith.constant dense<0xFF800000> : vector<8xf32>
    %33 = vector.multi_reduction <maximumf>, %32, %cst_24 [1] : vector<8x8xf32> to vector<8xf32>
    %34 = vector.shape_cast %33 : vector<8xf32> to vector<8x1xf32>
    %35 = vector.broadcast %34 : vector<8x1xf32> to vector<8x8xf32>
    %36 = arith.subf %32, %35 : vector<8x8xf32>
    %37 = math.exp %36 : vector<8x8xf32>
    %cst_25 = arith.constant dense<0.000000e+00> : vector<8xf32>
    %38 = vector.multi_reduction <add>, %37, %cst_25 [1] : vector<8x8xf32> to vector<8xf32>
    %39 = vector.shape_cast %38 : vector<8xf32> to vector<8x1xf32>
    %40 = vector.broadcast %39 : vector<8x1xf32> to vector<8x8xf32>
    %41 = arith.divf %37, %40 : vector<8x8xf32>
    %cst_26 = arith.constant dense<0.000000e+00> : vector<8x8xf32>
    %42 = tpu.matmul %41, %30, %cst_26 {dimension_numbers = #tpu.dot_dimension_numbers<[1], [0], [0], [1], [0, 0, 1, 1], [], []>} : vector<8x8xf32>, vector<8x8xf32>, vector<8x8xf32> -> vector<8x8xf32>
    %c0_27 = arith.constant 0 : index
    %c0_28 = arith.constant 0 : index
    %c0_29 = arith.constant 0 : index
    %43 = vector.load %arg4[%c0_27, %c0_28, %c0_29] : memref<4x8x32xf32, #tpu.memory_space<vmem>>, vector<1x8x32xf32>
    %44 = vector.shape_cast %43 : vector<1x8x32xf32> to vector<8x32xf32>
    %cst_30 = arith.constant dense<0.000000e+00> : vector<8x32xf32>
    %45 = tpu.matmul %42, %44, %cst_30 {dimension_numbers = #tpu.dot_dimension_numbers<[1], [0], [0], [1], [0, 0, 1, 1], [], []>} : vector<8x8xf32>, vector<8x32xf32>, vector<8x32xf32> -> vector<8x32xf32>
    %46 = arith.addf %9, %45 : vector<8x32xf32>
    %c3 = arith.constant 3 : index
    %c0_31 = arith.constant 0 : index
    %c0_32 = arith.constant 0 : index
    %47 = vector.load %arg2[%c3, %c0_31, %c0_32] : memref<12x32x8xf32, #tpu.memory_space<vmem>>, vector<1x32x8xf32>
    %48 = vector.shape_cast %47 : vector<1x32x8xf32> to vector<32x8xf32>
    %cst_33 = arith.constant dense<0.000000e+00> : vector<8x8xf32>
    %49 = tpu.matmul %0, %48, %cst_33 {dimension_numbers = #tpu.dot_dimension_numbers<[1], [0], [0], [1], [0, 0, 1, 1], [], []>} : vector<8x32xf32>, vector<32x8xf32>, vector<8x8xf32> -> vector<8x8xf32>
    %c3_34 = arith.constant 3 : index
    %c0_35 = arith.constant 0 : index
    %c0_36 = arith.constant 0 : index
    %50 = vector.load %arg3[%c3_34, %c0_35, %c0_36] : memref<12x1x8xf32, #tpu.memory_space<vmem>>, vector<1x1x8xf32>
    %51 = vector.shape_cast %50 : vector<1x1x8xf32> to vector<1x8xf32>
    %52 = vector.broadcast %51 : vector<1x8xf32> to vector<8x8xf32>
    %53 = arith.addf %49, %52 : vector<8x8xf32>
    %c4 = arith.constant 4 : index
    %c0_37 = arith.constant 0 : index
    %c0_38 = arith.constant 0 : index
    %54 = vector.load %arg2[%c4, %c0_37, %c0_38] : memref<12x32x8xf32, #tpu.memory_space<vmem>>, vector<1x32x8xf32>
    %55 = vector.shape_cast %54 : vector<1x32x8xf32> to vector<32x8xf32>
    %cst_39 = arith.constant dense<0.000000e+00> : vector<8x8xf32>
    %56 = tpu.matmul %0, %55, %cst_39 {dimension_numbers = #tpu.dot_dimension_numbers<[1], [0], [0], [1], [0, 0, 1, 1], [], []>} : vector<8x32xf32>, vector<32x8xf32>, vector<8x8xf32> -> vector<8x8xf32>
    %c4_40 = arith.constant 4 : index
    %c0_41 = arith.constant 0 : index
    %c0_42 = arith.constant 0 : index
    %57 = vector.load %arg3[%c4_40, %c0_41, %c0_42] : memref<12x1x8xf32, #tpu.memory_space<vmem>>, vector<1x1x8xf32>
    %58 = vector.shape_cast %57 : vector<1x1x8xf32> to vector<1x8xf32>
    %59 = vector.broadcast %58 : vector<1x8xf32> to vector<8x8xf32>
    %60 = arith.addf %56, %59 : vector<8x8xf32>
    %c5 = arith.constant 5 : index
    %c0_43 = arith.constant 0 : index
    %c0_44 = arith.constant 0 : index
    %61 = vector.load %arg2[%c5, %c0_43, %c0_44] : memref<12x32x8xf32, #tpu.memory_space<vmem>>, vector<1x32x8xf32>
    %62 = vector.shape_cast %61 : vector<1x32x8xf32> to vector<32x8xf32>
    %cst_45 = arith.constant dense<0.000000e+00> : vector<8x8xf32>
    %63 = tpu.matmul %0, %62, %cst_45 {dimension_numbers = #tpu.dot_dimension_numbers<[1], [0], [0], [1], [0, 0, 1, 1], [], []>} : vector<8x32xf32>, vector<32x8xf32>, vector<8x8xf32> -> vector<8x8xf32>
    %c5_46 = arith.constant 5 : index
    %c0_47 = arith.constant 0 : index
    %c0_48 = arith.constant 0 : index
    %64 = vector.load %arg3[%c5_46, %c0_47, %c0_48] : memref<12x1x8xf32, #tpu.memory_space<vmem>>, vector<1x1x8xf32>
    %65 = vector.shape_cast %64 : vector<1x1x8xf32> to vector<1x8xf32>
    %66 = vector.broadcast %65 : vector<1x8xf32> to vector<8x8xf32>
    %67 = arith.addf %63, %66 : vector<8x8xf32>
    %cst_49 = arith.constant dense<0.000000e+00> : vector<8x8xf32>
    %68 = tpu.matmul %53, %60, %cst_49 {dimension_numbers = #tpu.dot_dimension_numbers<[1], [1], [0], [0], [0, 0, 1, 0], [], []>} : vector<8x8xf32>, vector<8x8xf32>, vector<8x8xf32> -> vector<8x8xf32>
    %69 = arith.addf %68, %6 : vector<8x8xf32>
    %cst_50 = arith.constant dense<0xFF800000> : vector<8xf32>
    %70 = vector.multi_reduction <maximumf>, %69, %cst_50 [1] : vector<8x8xf32> to vector<8xf32>
    %71 = vector.shape_cast %70 : vector<8xf32> to vector<8x1xf32>
    %72 = vector.broadcast %71 : vector<8x1xf32> to vector<8x8xf32>
    %73 = arith.subf %69, %72 : vector<8x8xf32>
    %74 = math.exp %73 : vector<8x8xf32>
    %cst_51 = arith.constant dense<0.000000e+00> : vector<8xf32>
    %75 = vector.multi_reduction <add>, %74, %cst_51 [1] : vector<8x8xf32> to vector<8xf32>
    %76 = vector.shape_cast %75 : vector<8xf32> to vector<8x1xf32>
    %77 = vector.broadcast %76 : vector<8x1xf32> to vector<8x8xf32>
    %78 = arith.divf %74, %77 : vector<8x8xf32>
    %cst_52 = arith.constant dense<0.000000e+00> : vector<8x8xf32>
    %79 = tpu.matmul %78, %67, %cst_52 {dimension_numbers = #tpu.dot_dimension_numbers<[1], [0], [0], [1], [0, 0, 1, 1], [], []>} : vector<8x8xf32>, vector<8x8xf32>, vector<8x8xf32> -> vector<8x8xf32>
    %c1_53 = arith.constant 1 : index
    %c0_54 = arith.constant 0 : index
    %c0_55 = arith.constant 0 : index
    %80 = vector.load %arg4[%c1_53, %c0_54, %c0_55] : memref<4x8x32xf32, #tpu.memory_space<vmem>>, vector<1x8x32xf32>
    %81 = vector.shape_cast %80 : vector<1x8x32xf32> to vector<8x32xf32>
    %cst_56 = arith.constant dense<0.000000e+00> : vector<8x32xf32>
    %82 = tpu.matmul %79, %81, %cst_56 {dimension_numbers = #tpu.dot_dimension_numbers<[1], [0], [0], [1], [0, 0, 1, 1], [], []>} : vector<8x8xf32>, vector<8x32xf32>, vector<8x32xf32> -> vector<8x32xf32>
    %83 = arith.addf %46, %82 : vector<8x32xf32>
    %c6 = arith.constant 6 : index
    %c0_57 = arith.constant 0 : index
    %c0_58 = arith.constant 0 : index
    %84 = vector.load %arg2[%c6, %c0_57, %c0_58] : memref<12x32x8xf32, #tpu.memory_space<vmem>>, vector<1x32x8xf32>
    %85 = vector.shape_cast %84 : vector<1x32x8xf32> to vector<32x8xf32>
    %cst_59 = arith.constant dense<0.000000e+00> : vector<8x8xf32>
    %86 = tpu.matmul %0, %85, %cst_59 {dimension_numbers = #tpu.dot_dimension_numbers<[1], [0], [0], [1], [0, 0, 1, 1], [], []>} : vector<8x32xf32>, vector<32x8xf32>, vector<8x8xf32> -> vector<8x8xf32>
    %c6_60 = arith.constant 6 : index
    %c0_61 = arith.constant 0 : index
    %c0_62 = arith.constant 0 : index
    %87 = vector.load %arg3[%c6_60, %c0_61, %c0_62] : memref<12x1x8xf32, #tpu.memory_space<vmem>>, vector<1x1x8xf32>
    %88 = vector.shape_cast %87 : vector<1x1x8xf32> to vector<1x8xf32>
    %89 = vector.broadcast %88 : vector<1x8xf32> to vector<8x8xf32>
    %90 = arith.addf %86, %89 : vector<8x8xf32>
    %c7 = arith.constant 7 : index
    %c0_63 = arith.constant 0 : index
    %c0_64 = arith.constant 0 : index
    %91 = vector.load %arg2[%c7, %c0_63, %c0_64] : memref<12x32x8xf32, #tpu.memory_space<vmem>>, vector<1x32x8xf32>
    %92 = vector.shape_cast %91 : vector<1x32x8xf32> to vector<32x8xf32>
    %cst_65 = arith.constant dense<0.000000e+00> : vector<8x8xf32>
    %93 = tpu.matmul %0, %92, %cst_65 {dimension_numbers = #tpu.dot_dimension_numbers<[1], [0], [0], [1], [0, 0, 1, 1], [], []>} : vector<8x32xf32>, vector<32x8xf32>, vector<8x8xf32> -> vector<8x8xf32>
    %c7_66 = arith.constant 7 : index
    %c0_67 = arith.constant 0 : index
    %c0_68 = arith.constant 0 : index
    %94 = vector.load %arg3[%c7_66, %c0_67, %c0_68] : memref<12x1x8xf32, #tpu.memory_space<vmem>>, vector<1x1x8xf32>
    %95 = vector.shape_cast %94 : vector<1x1x8xf32> to vector<1x8xf32>
    %96 = vector.broadcast %95 : vector<1x8xf32> to vector<8x8xf32>
    %97 = arith.addf %93, %96 : vector<8x8xf32>
    %c8 = arith.constant 8 : index
    %c0_69 = arith.constant 0 : index
    %c0_70 = arith.constant 0 : index
    %98 = vector.load %arg2[%c8, %c0_69, %c0_70] : memref<12x32x8xf32, #tpu.memory_space<vmem>>, vector<1x32x8xf32>
    %99 = vector.shape_cast %98 : vector<1x32x8xf32> to vector<32x8xf32>
    %cst_71 = arith.constant dense<0.000000e+00> : vector<8x8xf32>
    %100 = tpu.matmul %0, %99, %cst_71 {dimension_numbers = #tpu.dot_dimension_numbers<[1], [0], [0], [1], [0, 0, 1, 1], [], []>} : vector<8x32xf32>, vector<32x8xf32>, vector<8x8xf32> -> vector<8x8xf32>
    %c8_72 = arith.constant 8 : index
    %c0_73 = arith.constant 0 : index
    %c0_74 = arith.constant 0 : index
    %101 = vector.load %arg3[%c8_72, %c0_73, %c0_74] : memref<12x1x8xf32, #tpu.memory_space<vmem>>, vector<1x1x8xf32>
    %102 = vector.shape_cast %101 : vector<1x1x8xf32> to vector<1x8xf32>
    %103 = vector.broadcast %102 : vector<1x8xf32> to vector<8x8xf32>
    %104 = arith.addf %100, %103 : vector<8x8xf32>
    %cst_75 = arith.constant dense<0.000000e+00> : vector<8x8xf32>
    %105 = tpu.matmul %90, %97, %cst_75 {dimension_numbers = #tpu.dot_dimension_numbers<[1], [1], [0], [0], [0, 0, 1, 0], [], []>} : vector<8x8xf32>, vector<8x8xf32>, vector<8x8xf32> -> vector<8x8xf32>
    %106 = arith.addf %105, %6 : vector<8x8xf32>
    %cst_76 = arith.constant dense<0xFF800000> : vector<8xf32>
    %107 = vector.multi_reduction <maximumf>, %106, %cst_76 [1] : vector<8x8xf32> to vector<8xf32>
    %108 = vector.shape_cast %107 : vector<8xf32> to vector<8x1xf32>
    %109 = vector.broadcast %108 : vector<8x1xf32> to vector<8x8xf32>
    %110 = arith.subf %106, %109 : vector<8x8xf32>
    %111 = math.exp %110 : vector<8x8xf32>
    %cst_77 = arith.constant dense<0.000000e+00> : vector<8xf32>
    %112 = vector.multi_reduction <add>, %111, %cst_77 [1] : vector<8x8xf32> to vector<8xf32>
    %113 = vector.shape_cast %112 : vector<8xf32> to vector<8x1xf32>
    %114 = vector.broadcast %113 : vector<8x1xf32> to vector<8x8xf32>
    %115 = arith.divf %111, %114 : vector<8x8xf32>
    %cst_78 = arith.constant dense<0.000000e+00> : vector<8x8xf32>
    %116 = tpu.matmul %115, %104, %cst_78 {dimension_numbers = #tpu.dot_dimension_numbers<[1], [0], [0], [1], [0, 0, 1, 1], [], []>} : vector<8x8xf32>, vector<8x8xf32>, vector<8x8xf32> -> vector<8x8xf32>
    %c2_79 = arith.constant 2 : index
    %c0_80 = arith.constant 0 : index
    %c0_81 = arith.constant 0 : index
    %117 = vector.load %arg4[%c2_79, %c0_80, %c0_81] : memref<4x8x32xf32, #tpu.memory_space<vmem>>, vector<1x8x32xf32>
    %118 = vector.shape_cast %117 : vector<1x8x32xf32> to vector<8x32xf32>
    %cst_82 = arith.constant dense<0.000000e+00> : vector<8x32xf32>
    %119 = tpu.matmul %116, %118, %cst_82 {dimension_numbers = #tpu.dot_dimension_numbers<[1], [0], [0], [1], [0, 0, 1, 1], [], []>} : vector<8x8xf32>, vector<8x32xf32>, vector<8x32xf32> -> vector<8x32xf32>
    %120 = arith.addf %83, %119 : vector<8x32xf32>
    %c9 = arith.constant 9 : index
    %c0_83 = arith.constant 0 : index
    %c0_84 = arith.constant 0 : index
    %121 = vector.load %arg2[%c9, %c0_83, %c0_84] : memref<12x32x8xf32, #tpu.memory_space<vmem>>, vector<1x32x8xf32>
    %122 = vector.shape_cast %121 : vector<1x32x8xf32> to vector<32x8xf32>
    %cst_85 = arith.constant dense<0.000000e+00> : vector<8x8xf32>
    %123 = tpu.matmul %0, %122, %cst_85 {dimension_numbers = #tpu.dot_dimension_numbers<[1], [0], [0], [1], [0, 0, 1, 1], [], []>} : vector<8x32xf32>, vector<32x8xf32>, vector<8x8xf32> -> vector<8x8xf32>
    %c9_86 = arith.constant 9 : index
    %c0_87 = arith.constant 0 : index
    %c0_88 = arith.constant 0 : index
    %124 = vector.load %arg3[%c9_86, %c0_87, %c0_88] : memref<12x1x8xf32, #tpu.memory_space<vmem>>, vector<1x1x8xf32>
    %125 = vector.shape_cast %124 : vector<1x1x8xf32> to vector<1x8xf32>
    %126 = vector.broadcast %125 : vector<1x8xf32> to vector<8x8xf32>
    %127 = arith.addf %123, %126 : vector<8x8xf32>
    %c10 = arith.constant 10 : index
    %c0_89 = arith.constant 0 : index
    %c0_90 = arith.constant 0 : index
    %128 = vector.load %arg2[%c10, %c0_89, %c0_90] : memref<12x32x8xf32, #tpu.memory_space<vmem>>, vector<1x32x8xf32>
    %129 = vector.shape_cast %128 : vector<1x32x8xf32> to vector<32x8xf32>
    %cst_91 = arith.constant dense<0.000000e+00> : vector<8x8xf32>
    %130 = tpu.matmul %0, %129, %cst_91 {dimension_numbers = #tpu.dot_dimension_numbers<[1], [0], [0], [1], [0, 0, 1, 1], [], []>} : vector<8x32xf32>, vector<32x8xf32>, vector<8x8xf32> -> vector<8x8xf32>
    %c10_92 = arith.constant 10 : index
    %c0_93 = arith.constant 0 : index
    %c0_94 = arith.constant 0 : index
    %131 = vector.load %arg3[%c10_92, %c0_93, %c0_94] : memref<12x1x8xf32, #tpu.memory_space<vmem>>, vector<1x1x8xf32>
    %132 = vector.shape_cast %131 : vector<1x1x8xf32> to vector<1x8xf32>
    %133 = vector.broadcast %132 : vector<1x8xf32> to vector<8x8xf32>
    %134 = arith.addf %130, %133 : vector<8x8xf32>
    %c11 = arith.constant 11 : index
    %c0_95 = arith.constant 0 : index
    %c0_96 = arith.constant 0 : index
    %135 = vector.load %arg2[%c11, %c0_95, %c0_96] : memref<12x32x8xf32, #tpu.memory_space<vmem>>, vector<1x32x8xf32>
    %136 = vector.shape_cast %135 : vector<1x32x8xf32> to vector<32x8xf32>
    %cst_97 = arith.constant dense<0.000000e+00> : vector<8x8xf32>
    %137 = tpu.matmul %0, %136, %cst_97 {dimension_numbers = #tpu.dot_dimension_numbers<[1], [0], [0], [1], [0, 0, 1, 1], [], []>} : vector<8x32xf32>, vector<32x8xf32>, vector<8x8xf32> -> vector<8x8xf32>
    %c11_98 = arith.constant 11 : index
    %c0_99 = arith.constant 0 : index
    %c0_100 = arith.constant 0 : index
    %138 = vector.load %arg3[%c11_98, %c0_99, %c0_100] : memref<12x1x8xf32, #tpu.memory_space<vmem>>, vector<1x1x8xf32>
    %139 = vector.shape_cast %138 : vector<1x1x8xf32> to vector<1x8xf32>
    %140 = vector.broadcast %139 : vector<1x8xf32> to vector<8x8xf32>
    %141 = arith.addf %137, %140 : vector<8x8xf32>
    %cst_101 = arith.constant dense<0.000000e+00> : vector<8x8xf32>
    %142 = tpu.matmul %127, %134, %cst_101 {dimension_numbers = #tpu.dot_dimension_numbers<[1], [1], [0], [0], [0, 0, 1, 0], [], []>} : vector<8x8xf32>, vector<8x8xf32>, vector<8x8xf32> -> vector<8x8xf32>
    %143 = arith.addf %142, %6 : vector<8x8xf32>
    %cst_102 = arith.constant dense<0xFF800000> : vector<8xf32>
    %144 = vector.multi_reduction <maximumf>, %143, %cst_102 [1] : vector<8x8xf32> to vector<8xf32>
    %145 = vector.shape_cast %144 : vector<8xf32> to vector<8x1xf32>
    %146 = vector.broadcast %145 : vector<8x1xf32> to vector<8x8xf32>
    %147 = arith.subf %143, %146 : vector<8x8xf32>
    %148 = math.exp %147 : vector<8x8xf32>
    %cst_103 = arith.constant dense<0.000000e+00> : vector<8xf32>
    %149 = vector.multi_reduction <add>, %148, %cst_103 [1] : vector<8x8xf32> to vector<8xf32>
    %150 = vector.shape_cast %149 : vector<8xf32> to vector<8x1xf32>
    %151 = vector.broadcast %150 : vector<8x1xf32> to vector<8x8xf32>
    %152 = arith.divf %148, %151 : vector<8x8xf32>
    %cst_104 = arith.constant dense<0.000000e+00> : vector<8x8xf32>
    %153 = tpu.matmul %152, %141, %cst_104 {dimension_numbers = #tpu.dot_dimension_numbers<[1], [0], [0], [1], [0, 0, 1, 1], [], []>} : vector<8x8xf32>, vector<8x8xf32>, vector<8x8xf32> -> vector<8x8xf32>
    %c3_105 = arith.constant 3 : index
    %c0_106 = arith.constant 0 : index
    %c0_107 = arith.constant 0 : index
    %154 = vector.load %arg4[%c3_105, %c0_106, %c0_107] : memref<4x8x32xf32, #tpu.memory_space<vmem>>, vector<1x8x32xf32>
    %155 = vector.shape_cast %154 : vector<1x8x32xf32> to vector<8x32xf32>
    %cst_108 = arith.constant dense<0.000000e+00> : vector<8x32xf32>
    %156 = tpu.matmul %153, %155, %cst_108 {dimension_numbers = #tpu.dot_dimension_numbers<[1], [0], [0], [1], [0, 0, 1, 1], [], []>} : vector<8x8xf32>, vector<8x32xf32>, vector<8x32xf32> -> vector<8x32xf32>
    %157 = arith.addf %120, %156 : vector<8x32xf32>
    %c0_109 = arith.constant 0 : index
    %c0_110 = arith.constant 0 : index
    %158 = vector.load %arg6[%c0_109, %c0_110] : memref<8x32xf32, #tpu.memory_space<vmem>>, vector<8x32xf32>
    tpu.vector_store %arg6[%c0_109, %c0_110], %157 {strides = array<i32>} : memref<8x32xf32, #tpu.memory_space<vmem>>, vector<8x32xf32>,
    return
  }
  func.func @transform_0(%arg0: i32) -> (i32, i32) {
    %c0_i32 = arith.constant 0 : i32
    %c0_i32_0 = arith.constant 0 : i32
    return %arg0, %c0_i32 : i32, i32
  }
  func.func @transform_1(%arg0: i32) -> (i32, i32, i32) {
    %c0_i32 = arith.constant 0 : i32
    %c0_i32_0 = arith.constant 0 : i32
    %c0_i32_1 = arith.constant 0 : i32
    %c0_i32_2 = arith.constant 0 : i32
    return %c0_i32, %c0_i32_0, %c0_i32_1 : i32, i32, i32
  }
  func.func @transform_2(%arg0: i32) -> (i32, i32, i32) {
    %c0_i32 = arith.constant 0 : i32
    %c0_i32_0 = arith.constant 0 : i32
    %c0_i32_1 = arith.constant 0 : i32
    %c0_i32_2 = arith.constant 0 : i32
    return %c0_i32, %c0_i32_0, %c0_i32_1 : i32, i32, i32
  }
  func.func @transform_3(%arg0: i32) -> (i32, i32, i32) {
    %c0_i32 = arith.constant 0 : i32
    %c0_i32_0 = arith.constant 0 : i32
    %c0_i32_1 = arith.constant 0 : i32
    %c0_i32_2 = arith.constant 0 : i32
    return %c0_i32, %c0_i32_0, %c0_i32_1 : i32, i32, i32
  }
  func.func @transform_4(%arg0: i32) -> (i32, i32) {
    %c0_i32 = arith.constant 0 : i32
    %c0_i32_0 = arith.constant 0 : i32
    %c0_i32_1 = arith.constant 0 : i32
    return %c0_i32, %c0_i32_0 : i32, i32
  }
  func.func @transform_5(%arg0: i32) -> (i32, i32) {
    %c0_i32 = arith.constant 0 : i32
    %c0_i32_0 = arith.constant 0 : i32
    return %arg0, %c0_i32 : i32, i32
  }
}

</mosaic_0001>

<llo_original>
// kernel: tpu_custom_call.1
$region0: #{tpu_custom_call.1}
  #allocation0 [shape = 'u32[]', space=smem, size = 0x4, offset = 0x4, fixed_abs, tag = 'smem constant byte address 0x4 - core index']
  #allocation1 [shape = 'u32[144,128]{1,0:T(1,128)}', space=vmem, size = 0x12000, scoped, tag = 'internal scratch']
  %s0 = inlined_call_operand.vmem [shape: f32[16,32], index: 0, kind: input, shape index: {}]
  %s1 = inlined_call_operand.vmem [shape: f32[12,32,8], index: 1, kind: input, shape index: {}]
  %s2 = inlined_call_operand.vmem [shape: f32[12,1,8], index: 2, kind: input, shape index: {}]
  %s3 = inlined_call_operand.vmem [shape: f32[4,8,32], index: 3, kind: input, shape index: {}]
  %s4 = inlined_call_operand.vmem [shape: f32[1,32], index: 4, kind: input, shape index: {}]
  %s5 = inlined_call_operand.hbm [shape: f32[16,32], index: 5, kind: output, shape index: {}]
  %s6 = sld [smem:[#allocation0]]
  $region53: #{tpu_custom_call.1} parent=0
    _
  %s8 = ssub.s32 1, %s6
  %s9 = scalar_select 0, %s8, %s6
  $region1: #{tpu_custom_call.1} parent=0
    #allocation2 [shape = 'u8[8192]{0}', space=vmem, size = 0x2000, scoped, tag = 'output window, operand 0']
    #allocation3 [shape = 's32[2]{0}', space=sflag, size = 0x8, scoped, tag = 'scoped memory for tpu_custom_call.1']
    %10 = vsyncpa [#allocation3], 0
    %s11 = scalar_lea.sflag [#allocation3], 1
    %12 = vsyncpa %s11, 0
    loop: start=0, step=1, limit=4
    $region2: #{tpu_custom_call.1} parent=1 // loop_pre_header
      _
    $region3: #{tpu_custom_call.1} parent=1 // loop_header
      %s14 = sphi 0, %s18
      %p15 = scmp.ge.s32.totalorder %s14, 4
      %s24 = sphi 0, %s26
      %s27 = sphi 0, %s24
      %s28 = sphi 0, %s27
      %s44 = sphi 0, %s28
      %s48 = sphi 0, %s48
      %s50 = sphi 0, %s48
      %s51 = sphi 0, %s50
      %s65 = sphi 0, %s51
      %s69 = sphi 0, %s69
      %s71 = sphi 0, %s69
      %s72 = sphi 0, %s71
      %s86 = sphi 0, %s72
      %s90 = sphi 0, %s90
      %s92 = sphi 0, %s90
      %s93 = sphi 0, %s92
      %s107 = sphi 0, %s93
      %s111 = sphi 0, %s111
      %s113 = sphi 0, %s111
      %s114 = sphi 0, %s113
      %s128 = sphi 0, %s114
      %s134 = sphi 0, %s136
      %s137 = sphi 0, %s134
      %s138 = sphi 0, %s137
      %s154 = sphi 0, %s138
    $region4: #{tpu_custom_call.1} parent=1 // loop_header_branch
      %17 = sbr.rel (%p15) target = $region8
    $region5: #{tpu_custom_call.1} parent=1 // loop_body
      %s19 = ssub.s32 %s14, 1
      %s20 = ssub.s32 %s14, 2
      %s21 = sadd.s32 %s14, 1
      %s22 = ssub.s32 %s14, %s21
      %p23 = scmp.eq.s32.totalorder %s22, 0
      %s25 = sadd.s32 %s24, 1
      %s26 = scalar_select %p23, %s24, %s25
      %p29 = pneg %p23
      %p30 = scmp.eq.s32.totalorder %s14, 1
      %p31 = por %p29, %p30
      %p32 = scmp.ne.s32.totalorder %s24, %s27
      %p33 = scmp.eq.s32.totalorder %s14, 0
      %p34 = por %p32, %p33
      %p35 = scmp.ne.s32.totalorder %s24, %s27
      %p36 = scmp.eq.s32.totalorder %s19, 1
      %p37 = por %p35, %p36
      %p38 = scmp.ne.s32.totalorder %s27, %s28
      %p39 = scmp.eq.s32.totalorder %s19, 0
      %p40 = por %p38, %p39
      %p41 = scmp.ne.s32.totalorder %s27, %s28
      %p42 = scmp.eq.s32.totalorder %s20, 1
      %p43 = por %p41, %p42
      %p45 = scmp.ne.s32.totalorder %s28, %s44
      %p46 = scmp.eq.s32.totalorder %s20, 0
      %p47 = por %p45, %p46
      %s49 = sadd.s32 %s48, 1
      %p52 = scmp.eq.s32.totalorder %s14, 1
      %p53 = scmp.ne.s32.totalorder %s48, %s50
      %p54 = scmp.eq.s32.totalorder %s14, 0
      %p55 = por %p53, %p54
      %p56 = scmp.ne.s32.totalorder %s48, %s50
      %p57 = scmp.eq.s32.totalorder %s19, 1
      %p58 = por %p56, %p57
      %p59 = scmp.ne.s32.totalorder %s50, %s51
      %p60 = scmp.eq.s32.totalorder %s19, 0
      %p61 = por %p59, %p60
      %p62 = scmp.ne.s32.totalorder %s50, %s51
      %p63 = scmp.eq.s32.totalorder %s20, 1
      %p64 = por %p62, %p63
      %p66 = scmp.ne.s32.totalorder %s51, %s65
      %p67 = scmp.eq.s32.totalorder %s20, 0
      %p68 = por %p66, %p67
      %s70 = sadd.s32 %s69, 1
      %p73 = scmp.eq.s32.totalorder %s14, 1
      %p74 = scmp.ne.s32.totalorder %s69, %s71
      %p75 = scmp.eq.s32.totalorder %s14, 0
      %p76 = por %p74, %p75
      %p77 = scmp.ne.s32.totalorder %s69, %s71
      %p78 = scmp.eq.s32.totalorder %s19, 1
      %p79 = por %p77, %p78
      %p80 = scmp.ne.s32.totalorder %s71, %s72
      %p81 = scmp.eq.s32.totalorder %s19, 0
      %p82 = por %p80, %p81
      %p83 = scmp.ne.s32.totalorder %s71, %s72
      %p84 = scmp.eq.s32.totalorder %s20, 1
      %p85 = por %p83, %p84
      %p87 = scmp.ne.s32.totalorder %s72, %s86
      %p88 = scmp.eq.s32.totalorder %s20, 0
      %p89 = por %p87, %p88
      %s91 = sadd.s32 %s90, 1
      %p94 = scmp.eq.s32.totalorder %s14, 1
      %p95 = scmp.ne.s32.totalorder %s90, %s92
      %p96 = scmp.eq.s32.totalorder %s14, 0
      %p97 = por %p95, %p96
      %p98 = scmp.ne.s32.totalorder %s90, %s92
      %p99 = scmp.eq.s32.totalorder %s19, 1
      %p100 = por %p98, %p99
      %p101 = scmp.ne.s32.totalorder %s92, %s93
      %p102 = scmp.eq.s32.totalorder %s19, 0
      %p103 = por %p101, %p102
      %p104 = scmp.ne.s32.totalorder %s92, %s93
      %p105 = scmp.eq.s32.totalorder %s20, 1
      %p106 = por %p104, %p105
      %p108 = scmp.ne.s32.totalorder %s93, %s107
      %p109 = scmp.eq.s32.totalorder %s20, 0
      %p110 = por %p108, %p109
      %s112 = sadd.s32 %s111, 1
      %p115 = scmp.eq.s32.totalorder %s14, 1
      %p116 = scmp.ne.s32.totalorder %s111, %s113
      %p117 = scmp.eq.s32.totalorder %s14, 0
      %p118 = por %p116, %p117
      %p119 = scmp.ne.s32.totalorder %s111, %s113
      %p120 = scmp.eq.s32.totalorder %s19, 1
      %p121 = por %p119, %p120
      %p122 = scmp.ne.s32.totalorder %s113, %s114
      %p123 = scmp.eq.s32.totalorder %s19, 0
      %p124 = por %p122, %p123
      %p125 = scmp.ne.s32.totalorder %s113, %s114
      %p126 = scmp.eq.s32.totalorder %s20, 1
      %p127 = por %p125, %p126
      %p129 = scmp.ne.s32.totalorder %s114, %s128
      %p130 = scmp.eq.s32.totalorder %s20, 0
      %p131 = por %p129, %p130
      %s132 = ssub.s32 %s14, %s21
      %p133 = scmp.eq.s32.totalorder %s132, 0
      %s135 = sadd.s32 %s134, 1
      %s136 = scalar_select %p133, %s134, %s135
      %p139 = pneg %p133
      %p140 = scmp.eq.s32.totalorder %s14, 1
      %p141 = por %p139, %p140
      %p142 = scmp.ne.s32.totalorder %s134, %s137
      %p143 = scmp.eq.s32.totalorder %s14, 0
      %p144 = por %p142, %p143
      %p145 = scmp.ne.s32.totalorder %s134, %s137
      %p146 = scmp.eq.s32.totalorder %s19, 1
      %p147 = por %p145, %p146
      %p148 = scmp.ne.s32.totalorder %s137, %s138
      %p149 = scmp.eq.s32.totalorder %s19, 0
      %p150 = por %p148, %p149
      %p151 = scmp.ne.s32.totalorder %s137, %s138
      %p152 = scmp.eq.s32.totalorder %s20, 1
      %p153 = por %p151, %p152
      %p155 = scmp.ne.s32.totalorder %s138, %s154
      %p156 = scmp.eq.s32.totalorder %s20, 0
      %p157 = por %p155, %p156
      %p158 = scmp.le.s32.totalorder 1, %s14
      %p159 = scmp.lt.s32.totalorder %s14, 3
      %p160 = pnand %p158, %p159
      %p161 = pneg %p160
      // Predicated region
      $region9: #{tpu_custom_call.1} parent=5 // pred_check
        _
      $region10: #{tpu_custom_call.1} parent=5 // pred_check_branch
        %163 = sbr.rel (%p160) target = $region12
      $region11: #{tpu_custom_call.1} parent=5 // pred_region
        %s164 = ssub.s32 %s14, 1
        // Predicated region
        $region13: #{tpu_custom_call.1} parent=11 // pred_check
          %p165 = pneg %p61
        $region14: #{tpu_custom_call.1} parent=11 // pred_check_branch
          %167 = sbr.rel (%p165) target = $region16
        $region15: #{tpu_custom_call.1} parent=11 // pred_region
          _
        $region16: #{tpu_custom_call.1} parent=11 // pred_fallthru
          _
        // Predicated region
        $region17: #{tpu_custom_call.1} parent=11 // pred_check
          %p168 = pneg %p82
        $region18: #{tpu_custom_call.1} parent=11 // pred_check_branch
          %170 = sbr.rel (%p168) target = $region20
        $region19: #{tpu_custom_call.1} parent=11 // pred_region
          _
        $region20: #{tpu_custom_call.1} parent=11 // pred_fallthru
          _
        // Predicated region
        $region21: #{tpu_custom_call.1} parent=11 // pred_check
          %p171 = pneg %p103
        $region22: #{tpu_custom_call.1} parent=11 // pred_check_branch
          %173 = sbr.rel (%p171) target = $region24
        $region23: #{tpu_custom_call.1} parent=11 // pred_region
          _
        $region24: #{tpu_custom_call.1} parent=11 // pred_fallthru
          _
        // Predicated region
        $region25: #{tpu_custom_call.1} parent=11 // pred_check
          %p174 = pneg %p124
        $region26: #{tpu_custom_call.1} parent=11 // pred_check_branch
          %176 = sbr.rel (%p174) target = $region28
        $region27: #{tpu_custom_call.1} parent=11 // pred_region
          _
        $region28: #{tpu_custom_call.1} parent=11 // pred_fallthru
          _
      $region12: #{tpu_custom_call.1} parent=5 // pred_fallthru
        _
      %p177 = scmp.lt.s32.totalorder %s14, 2
      // Predicated region
      $region29: #{tpu_custom_call.1} parent=5 // pred_check
        %p178 = pneg %p177
      $region30: #{tpu_custom_call.1} parent=5 // pred_check_branch
        %180 = sbr.rel (%p178) target = $region32
      $region31: #{tpu_custom_call.1} parent=5 // pred_region
        // Predicated region
        $region33: #{tpu_custom_call.1} parent=31 // pred_check
          %p181 = pneg %p34
        $region34: #{tpu_custom_call.1} parent=31 // pred_check_branch
          %183 = sbr.rel (%p181) target = $region36
        $region35: #{tpu_custom_call.1} parent=31 // pred_region
          %p184 = scmp.lt.s32.totalorder %s14, 1
          %s185 = scalar_select %p184, %s14, 1
          %s186 = smul.addr %s185, 8
          %s187 = scalar_lea.vmem %s0, %s186
        $region36: #{tpu_custom_call.1} parent=31 // pred_fallthru
          _
      $region32: #{tpu_custom_call.1} parent=5 // pred_fallthru
        _
      %p188 = scmp.le.s32.totalorder 1, %s14
      %p189 = scmp.lt.s32.totalorder %s14, 3
      %p190 = pnand %p188, %p189
      %p191 = pneg %p190
      // Predicated region
      $region37: #{tpu_custom_call.1} parent=5 // pred_check
        _
      $region38: #{tpu_custom_call.1} parent=5 // pred_check_branch
        %193 = sbr.rel (%p190) target = $region40
      $region39: #{tpu_custom_call.1} parent=5 // pred_region
        %s194 = ssub.s32 %s14, 1
        %p195 = scmp.lt.s32.totalorder %s19, 1
        %s196 = scalar_select %p195, %s19, 1
        %s197 = smul.addr %s196, 8
        %s198 = scalar_lea.vmem %s0, %s197
        %p199 = pneg %p40
        %p200 = pneg %p37
        %p201 = pneg %p61
        %p202 = pneg %p58
        %p203 = pneg %p82
        %p204 = pneg %p79
        %p205 = pneg %p103
        %p206 = pneg %p100
        %p207 = pneg %p124
        %p208 = pneg %p121
        %p209 = pneg %p150
        %p210 = pneg %p147
        %s211 = sand.u32 %s137, 1
        %s212 = scalar_lea.sflag [#allocation3], %s211
        %s213 = sand.u32 %s137, 1
        %s214 = smul.addr %s213, 8
        %s215 = scalar_lea.vmem [#allocation2], %s214
        %p216 = scmp.lt.s32.totalorder %s19, 1
        %s217 = scalar_select %p216, %s19, 1
        %s218 = smul.addr %s217, 8
        %s219 = scalar_lea.vmem %s0, %s218
        %v220 = vld [vmem:[%s219] sm:$0xff]
        %v221 = vlaneseq
        %v222 = vshrl.u32 %v221, 7
        %v223 = vlaneseq
        %v224 = vand.u32 %v223, 127
        %vm225 = vcmp.ge.s32.totalorder %v222, %v224
        %v226 = vsel %vm225, 0.0, -1000000.0
        %v227 = vld [vmem:[%s4] sm:$0x1]
        %v229 = vlaneseq
        %v230 = vshrl.u32 %v229, 7
        %v231 = vsub.s32 0, %v230
        %v232 = vrot.slane %v227, %v231
        %v234 = vld [vmem:[%s1] sm:$0xff]
        %v235 = vld [vmem:[%s1 + $0x8] sm:$0xff]
        %v236 = vld [vmem:[%s1 + $0x10] sm:$0xff]
        %v237 = vld [vmem:[%s1 + $0x18] sm:$0xff]
        %v238 = vld [vmem:[%s2] sm:$0x1]
        %v240 = vlaneseq
        %v241 = vshrl.u32 %v240, 7
        %v242 = vsub.s32 0, %v241
        %v243 = vrot.slane %v238, %v242
        %vm245 = vcmask 261120
        %v247 = vsel %vm245, %v220, 0
        %249 = vmatprep.subr.mxu0 0.0
        %250 = vmatpush1.msra.mxu0 %v234
        %251 = vmatprep.subr.mxu0 0.0
        %252 = vmatpush1.msra.mxu0 %v235
        %253 = vmatprep.subr.mxu0 0.0
        %254 = vmatpush1.msra.mxu0 %v236
        %255 = vmatprep.subr.mxu0 0.0
        %256 = vmatpush1.msra.mxu0 %v237
        %257 = vmatprep.subr.mxu0 0.0
        %258 = vmatpush1.msra.mxu0 0.0
        %259 = vmatprep.subr.mxu0 0.0
        %260 = vmatpush1.msra.mxu0 0.0
        %261 = vmatprep.subr.mxu0 0.0
        %262 = vmatpush1.msra.mxu0 0.0
        %263 = vmatprep.subr.mxu0 0.0
        %264 = vmatpush1.msra.mxu0 0.0
        %265 = vmatprep.subr.mxu0 0.0
        %266 = vmatpush1.msra.mxu0 0.0
        %267 = vmatprep.subr.mxu0 0.0
        %268 = vmatpush1.msra.mxu0 0.0
        %269 = vmatprep.subr.mxu0 0.0
        %270 = vmatpush1.msra.mxu0 0.0
        %271 = vmatprep.subr.mxu0 0.0
        %272 = vmatpush1.msra.mxu0 0.0
        %273 = vmatprep.subr.mxu0 0.0
        %274 = vmatpush1.msra.mxu0 0.0
        %275 = vmatprep.subr.mxu0 0.0
        %276 = vmatpush1.msra.mxu0 0.0
        %277 = vmatprep.subr.mxu0 0.0
        %278 = vmatpush1.msra.mxu0 0.0
        %279 = vmatprep.subr.mxu0 0.0
        %280 = vmatpush1.msra.mxu0 0.0
        %281 = vmatprep.subr.mxu0 0.0
        %282 = vmatpush1.msra.mxu0 0.0
        %283 = vmatprep.subr.mxu0 0.0
        %284 = vmatpush1.msra.mxu0 0.0
        %285 = vmatprep.subr.mxu0 0.0
        %286 = vmatpush1.msra.mxu0 0.0
        %287 = vmatprep.subr.mxu0 0.0
        %288 = vmatpush1.msra.mxu0 0.0
        %289 = vmatprep.subr.mxu0 0.0
        %290 = vmatpush1.msra.mxu0 0.0
        %291 = vmatprep.subr.mxu0 0.0
        %292 = vmatpush1.msra.mxu0 0.0
        %293 = vmatprep.subr.mxu0 0.0
        %294 = vmatpush1.msra.mxu0 0.0
        %295 = vmatprep.subr.mxu0 0.0
        %296 = vmatpush1.msra.mxu0 0.0
        %297 = vmatprep.subr.mxu0 0.0
        %298 = vmatpush1.msra.mxu0 0.0
        %299 = vmatprep.subr.mxu0 0.0
        %300 = vmatpush1.msra.mxu0 0.0
        %301 = vmatprep.subr.mxu0 0.0
        %302 = vmatpush1.msra.mxu0 0.0
        %303 = vmatprep.subr.mxu0 0.0
        %304 = vmatpush1.msra.mxu0 0.0
        %305 = vmatprep.subr.mxu0 0.0
        %306 = vmatpush1.msra.mxu0 0.0
        %307 = vmatprep.subr.mxu0 0.0
        %308 = vmatpush1.msra.mxu0 0.0
        %309 = vmatprep.subr.mxu0 0.0
        %310 = vmatpush1.msra.mxu0 0.0
        %311 = vmatprep.subr.mxu0 0.0
        %312 = vmatpush1.msra.mxu0 0.0
        %313 = vmatprep.mubr.f32.mxu0 0.0
        %314 = vmatmul.mubr.f32.gmra.mrb[0].mxu0 %v247
        %v315 = vpop.f32.mrb[0].mxu0
        %v316 = vadd.f32 %v243, %v315
        %v317 = vpop.f32.mrb[0].mxu0
        %318 = vdwg.mxu0
        %s319 = scalar_lea.vmem %s1, 32
        %v320 = vld [vmem:[%s319] sm:$0xff]
        %v321 = vld [vmem:[%s319 + $0x8] sm:$0xff]
        %v322 = vld [vmem:[%s319 + $0x10] sm:$0xff]
        %v323 = vld [vmem:[%s319 + $0x18] sm:$0xff]
        %s324 = scalar_lea.vmem %s2, 1
        %v325 = vld [vmem:[%s324] sm:$0x1]
        %v327 = vlaneseq
        %v328 = vshrl.u32 %v327, 7
        %v329 = vsub.s32 0, %v328
        %v330 = vrot.slane %v325, %v329
        %332 = vmatprep.subr.mxu0 0.0
        %333 = vmatpush1.msra.mxu0 %v320
        %334 = vmatprep.subr.mxu0 0.0
        %335 = vmatpush1.msra.mxu0 %v321
        %336 = vmatprep.subr.mxu0 0.0
        %337 = vmatpush1.msra.mxu0 %v322
        %338 = vmatprep.subr.mxu0 0.0
        %339 = vmatpush1.msra.mxu0 %v323
        %340 = vmatprep.subr.mxu0 0.0
        %341 = vmatpush1.msra.mxu0 0.0
        %342 = vmatprep.subr.mxu0 0.0
        %343 = vmatpush1.msra.mxu0 0.0
        %344 = vmatprep.subr.mxu0 0.0
        %345 = vmatpush1.msra.mxu0 0.0
        %346 = vmatprep.subr.mxu0 0.0
        %347 = vmatpush1.msra.mxu0 0.0
        %348 = vmatprep.subr.mxu0 0.0
        %349 = vmatpush1.msra.mxu0 0.0
        %350 = vmatprep.subr.mxu0 0.0
        %351 = vmatpush1.msra.mxu0 0.0
        %352 = vmatprep.subr.mxu0 0.0
        %353 = vmatpush1.msra.mxu0 0.0
        %354 = vmatprep.subr.mxu0 0.0
        %355 = vmatpush1.msra.mxu0 0.0
        %356 = vmatprep.subr.mxu0 0.0
        %357 = vmatpush1.msra.mxu0 0.0
        %358 = vmatprep.subr.mxu0 0.0
        %359 = vmatpush1.msra.mxu0 0.0
        %360 = vmatprep.subr.mxu0 0.0
        %361 = vmatpush1.msra.mxu0 0.0
        %362 = vmatprep.subr.mxu0 0.0
        %363 = vmatpush1.msra.mxu0 0.0
        %364 = vmatprep.subr.mxu0 0.0
        %365 = vmatpush1.msra.mxu0 0.0
        %366 = vmatprep.subr.mxu0 0.0
        %367 = vmatpush1.msra.mxu0 0.0
        %368 = vmatprep.subr.mxu0 0.0
        %369 = vmatpush1.msra.mxu0 0.0
        %370 = vmatprep.subr.mxu0 0.0
        %371 = vmatpush1.msra.mxu0 0.0
        %372 = vmatprep.subr.mxu0 0.0
        %373 = vmatpush1.msra.mxu0 0.0
        %374 = vmatprep.subr.mxu0 0.0
        %375 = vmatpush1.msra.mxu0 0.0
        %376 = vmatprep.subr.mxu0 0.0
        %377 = vmatpush1.msra.mxu0 0.0
        %378 = vmatprep.subr.mxu0 0.0
        %379 = vmatpush1.msra.mxu0 0.0
        %380 = vmatprep.subr.mxu0 0.0
        %381 = vmatpush1.msra.mxu0 0.0
        %382 = vmatprep.subr.mxu0 0.0
        %383 = vmatpush1.msra.mxu0 0.0
        %384 = vmatprep.subr.mxu0 0.0
        %385 = vmatpush1.msra.mxu0 0.0
        %386 = vmatprep.subr.mxu0 0.0
        %387 = vmatpush1.msra.mxu0 0.0
        %388 = vmatprep.subr.mxu0 0.0
        %389 = vmatpush1.msra.mxu0 0.0
        %390 = vmatprep.subr.mxu0 0.0
        %391 = vmatpush1.msra.mxu0 0.0
        %392 = vmatprep.subr.mxu0 0.0
        %393 = vmatpush1.msra.mxu0 0.0
        %394 = vmatprep.subr.mxu0 0.0
        %395 = vmatpush1.msra.mxu0 0.0
        %396 = vmatprep.mubr.f32.mxu0 0.0
        %397 = vmatmul.mubr.f32.gmra.mrb[0].mxu0 %v247
        %v398 = vpop.f32.mrb[0].mxu0
        %v399 = vadd.f32 %v330, %v398
        %v400 = vpop.f32.mrb[0].mxu0
        %401 = vdwg.mxu0
        %s402 = scalar_lea.vmem %s1, 64
        %v403 = vld [vmem:[%s402] sm:$0xff]
        %v404 = vld [vmem:[%s402 + $0x8] sm:$0xff]
        %v405 = vld [vmem:[%s402 + $0x10] sm:$0xff]
        %v406 = vld [vmem:[%s402 + $0x18] sm:$0xff]
        %s407 = scalar_lea.vmem %s2, 2
        %v408 = vld [vmem:[%s407] sm:$0x1]
        %v410 = vlaneseq
        %v411 = vshrl.u32 %v410, 7
        %v412 = vsub.s32 0, %v411
        %v413 = vrot.slane %v408, %v412
        %415 = vmatprep.subr.mxu0 0.0
        %416 = vmatpush1.msra.mxu0 %v403
        %417 = vmatprep.subr.mxu0 0.0
        %418 = vmatpush1.msra.mxu0 %v404
        %419 = vmatprep.subr.mxu0 0.0
        %420 = vmatpush1.msra.mxu0 %v405
        %421 = vmatprep.subr.mxu0 0.0
        %422 = vmatpush1.msra.mxu0 %v406
        %423 = vmatprep.subr.mxu0 0.0
        %424 = vmatpush1.msra.mxu0 0.0
        %425 = vmatprep.subr.mxu0 0.0
        %426 = vmatpush1.msra.mxu0 0.0
        %427 = vmatprep.subr.mxu0 0.0
        %428 = vmatpush1.msra.mxu0 0.0
        %429 = vmatprep.subr.mxu0 0.0
        %430 = vmatpush1.msra.mxu0 0.0
        %431 = vmatprep.subr.mxu0 0.0
        %432 = vmatpush1.msra.mxu0 0.0
        %433 = vmatprep.subr.mxu0 0.0
        %434 = vmatpush1.msra.mxu0 0.0
        %435 = vmatprep.subr.mxu0 0.0
        %436 = vmatpush1.msra.mxu0 0.0
        %437 = vmatprep.subr.mxu0 0.0
        %438 = vmatpush1.msra.mxu0 0.0
        %439 = vmatprep.subr.mxu0 0.0
        %440 = vmatpush1.msra.mxu0 0.0
        %441 = vmatprep.subr.mxu0 0.0
        %442 = vmatpush1.msra.mxu0 0.0
        %443 = vmatprep.subr.mxu0 0.0
        %444 = vmatpush1.msra.mxu0 0.0
        %445 = vmatprep.subr.mxu0 0.0
        %446 = vmatpush1.msra.mxu0 0.0
        %447 = vmatprep.subr.mxu0 0.0
        %448 = vmatpush1.msra.mxu0 0.0
        %449 = vmatprep.subr.mxu0 0.0
        %450 = vmatpush1.msra.mxu0 0.0
        %451 = vmatprep.subr.mxu0 0.0
        %452 = vmatpush1.msra.mxu0 0.0
        %453 = vmatprep.subr.mxu0 0.0
        %454 = vmatpush1.msra.mxu0 0.0
        %455 = vmatprep.subr.mxu0 0.0
        %456 = vmatpush1.msra.mxu0 0.0
        %457 = vmatprep.subr.mxu0 0.0
        %458 = vmatpush1.msra.mxu0 0.0
        %459 = vmatprep.subr.mxu0 0.0
        %460 = vmatpush1.msra.mxu0 0.0
        %461 = vmatprep.subr.mxu0 0.0
        %462 = vmatpush1.msra.mxu0 0.0
        %463 = vmatprep.subr.mxu0 0.0
        %464 = vmatpush1.msra.mxu0 0.0
        %465 = vmatprep.subr.mxu0 0.0
        %466 = vmatpush1.msra.mxu0 0.0
        %467 = vmatprep.subr.mxu0 0.0
        %468 = vmatpush1.msra.mxu0 0.0
        %469 = vmatprep.subr.mxu0 0.0
        %470 = vmatpush1.msra.mxu0 0.0
        %471 = vmatprep.subr.mxu0 0.0
        %472 = vmatpush1.msra.mxu0 0.0
        %473 = vmatprep.subr.mxu0 0.0
        %474 = vmatpush1.msra.mxu0 0.0
        %475 = vmatprep.subr.mxu0 0.0
        %476 = vmatpush1.msra.mxu0 0.0
        %477 = vmatprep.subr.mxu0 0.0
        %478 = vmatpush1.msra.mxu0 0.0
        %479 = vmatprep.mubr.f32.mxu0 0.0
        %480 = vmatmul.mubr.f32.gmra.mrb[0].mxu0 %v247
        %v481 = vpop.f32.mrb[0].mxu0
        %v482 = vadd.f32 %v413, %v481
        %v483 = vpop.f32.mrb[0].mxu0
        %484 = vdwg.mxu0
        %vm485 = vcmask 64512
        %v487 = vsel %vm485, %v316, 0
        %v490 = vsel %vm485, %v399, 0
        %492 = vmatprep.subr.mxu0 0.0
        %493 = vmatpush1.xpose.msra.mxu0 %v490
        %494 = vmatprep.subr.mxu0 0.0
        %495 = vmatpush1.xpose.msra.mxu0 0.0
        %496 = vmatprep.subr.mxu0 0.0
        %497 = vmatpush1.xpose.msra.mxu0 0.0
        %498 = vmatprep.subr.mxu0 0.0
        %499 = vmatpush1.xpose.msra.mxu0 0.0
        %500 = vmatprep.subr.mxu0 0.0
        %501 = vmatpush1.xpose.msra.mxu0 0.0
        %502 = vmatprep.subr.mxu0 0.0
        %503 = vmatpush1.xpose.msra.mxu0 0.0
        %504 = vmatprep.subr.mxu0 0.0
        %505 = vmatpush1.xpose.msra.mxu0 0.0
        %506 = vmatprep.subr.mxu0 0.0
        %507 = vmatpush1.xpose.msra.mxu0 0.0
        %508 = vmatprep.subr.mxu0 0.0
        %509 = vmatpush1.xpose.msra.mxu0 0.0
        %510 = vmatprep.subr.mxu0 0.0
        %511 = vmatpush1.xpose.msra.mxu0 0.0
        %512 = vmatprep.subr.mxu0 0.0
        %513 = vmatpush1.xpose.msra.mxu0 0.0
        %514 = vmatprep.subr.mxu0 0.0
        %515 = vmatpush1.xpose.msra.mxu0 0.0
        %516 = vmatprep.subr.mxu0 0.0
        %517 = vmatpush1.xpose.msra.mxu0 0.0
        %518 = vmatprep.subr.mxu0 0.0
        %519 = vmatpush1.xpose.msra.mxu0 0.0
        %520 = vmatprep.subr.mxu0 0.0
        %521 = vmatpush1.xpose.msra.mxu0 0.0
        %522 = vmatprep.subr.mxu0 0.0
        %523 = vmatpush1.xpose.msra.mxu0 0.0
        %524 = vmatprep.subr.mxu0 0.0
        %525 = vmatpush1.xpose.msra.mxu0 0.0
        %526 = vmatprep.subr.mxu0 0.0
        %527 = vmatpush1.xpose.msra.mxu0 0.0
        %528 = vmatprep.subr.mxu0 0.0
        %529 = vmatpush1.xpose.msra.mxu0 0.0
        %530 = vmatprep.subr.mxu0 0.0
        %531 = vmatpush1.xpose.msra.mxu0 0.0
        %532 = vmatprep.subr.mxu0 0.0
        %533 = vmatpush1.xpose.msra.mxu0 0.0
        %534 = vmatprep.subr.mxu0 0.0
        %535 = vmatpush1.xpose.msra.mxu0 0.0
        %536 = vmatprep.subr.mxu0 0.0
        %537 = vmatpush1.xpose.msra.mxu0 0.0
        %538 = vmatprep.subr.mxu0 0.0
        %539 = vmatpush1.xpose.msra.mxu0 0.0
        %540 = vmatprep.subr.mxu0 0.0
        %541 = vmatpush1.xpose.msra.mxu0 0.0
        %542 = vmatprep.subr.mxu0 0.0
        %543 = vmatpush1.xpose.msra.mxu0 0.0
        %544 = vmatprep.subr.mxu0 0.0
        %545 = vmatpush1.xpose.msra.mxu0 0.0
        %546 = vmatprep.subr.mxu0 0.0
        %547 = vmatpush1.xpose.msra.mxu0 0.0
        %548 = vmatprep.subr.mxu0 0.0
        %549 = vmatpush1.xpose.msra.mxu0 0.0
        %550 = vmatprep.subr.mxu0 0.0
        %551 = vmatpush1.xpose.msra.mxu0 0.0
        %552 = vmatprep.subr.mxu0 0.0
        %553 = vmatpush1.xpose.msra.mxu0 0.0
        %554 = vmatprep.subr.mxu0 0.0
        %555 = vmatpush1.xpose.msra.mxu0 0.0
        %556 = vmatprep.mubr.f32.mxu0 0.0
        %557 = vmatmul.mubr.f32.gmra.mrb[0].mxu0 %v487
        %v558 = vpop.f32.mrb[0].mxu0
        %v559 = vadd.f32 %v226, %v558
        %v560 = vpop.f32.mrb[0].mxu0
        %561 = vdwg.mxu0
        %v562 = vsel %vm485, %v559, -inf
        %563 = vmax.xlane.f32.xlu0 %v562
        %v564 = vpop.xlane.xlu0 %563
        %v565 = vsub.f32 %v559, %v564
        %v566 = vmul.f32 %v565, 1.442695
        %v567 = vpow.pop %v566
        %v568 = vsel %vm485, %v567, 0.0
        %569 = vadd.xlane.f32.xlu0 %v568
        %v570 = vpop.xlane.xlu0 %569
        %v571 = vrcp.pop %v570
        %v572 = vmul.f32 %v567, %v571
        %v574 = vsel %vm485, %v572, 0
        %576 = vmatprep.subr.mxu0 0.0
        %577 = vmatpush1.msra.mxu0 %v482
        %578 = vmatprep.subr.mxu0 0.0
        %579 = vmatpush1.msra.mxu0 0.0
        %580 = vmatprep.subr.mxu0 0.0
        %581 = vmatpush1.msra.mxu0 0.0
        %582 = vmatprep.subr.mxu0 0.0
        %583 = vmatpush1.msra.mxu0 0.0
        %584 = vmatprep.subr.mxu0 0.0
        %585 = vmatpush1.msra.mxu0 0.0
        %586 = vmatprep.subr.mxu0 0.0
        %587 = vmatpush1.msra.mxu0 0.0
        %588 = vmatprep.subr.mxu0 0.0
        %589 = vmatpush1.msra.mxu0 0.0
        %590 = vmatprep.subr.mxu0 0.0
        %591 = vmatpush1.msra.mxu0 0.0
        %592 = vmatprep.subr.mxu0 0.0
        %593 = vmatpush1.msra.mxu0 0.0
        %594 = vmatprep.subr.mxu0 0.0
        %595 = vmatpush1.msra.mxu0 0.0
        %596 = vmatprep.subr.mxu0 0.0
        %597 = vmatpush1.msra.mxu0 0.0
        %598 = vmatprep.subr.mxu0 0.0
        %599 = vmatpush1.msra.mxu0 0.0
        %600 = vmatprep.subr.mxu0 0.0
        %601 = vmatpush1.msra.mxu0 0.0
        %602 = vmatprep.subr.mxu0 0.0
        %603 = vmatpush1.msra.mxu0 0.0
        %604 = vmatprep.subr.mxu0 0.0
        %605 = vmatpush1.msra.mxu0 0.0
        %606 = vmatprep.subr.mxu0 0.0
        %607 = vmatpush1.msra.mxu0 0.0
        %608 = vmatprep.subr.mxu0 0.0
        %609 = vmatpush1.msra.mxu0 0.0
        %610 = vmatprep.subr.mxu0 0.0
        %611 = vmatpush1.msra.mxu0 0.0
        %612 = vmatprep.subr.mxu0 0.0
        %613 = vmatpush1.msra.mxu0 0.0
        %614 = vmatprep.subr.mxu0 0.0
        %615 = vmatpush1.msra.mxu0 0.0
        %616 = vmatprep.subr.mxu0 0.0
        %617 = vmatpush1.msra.mxu0 0.0
        %618 = vmatprep.subr.mxu0 0.0
        %619 = vmatpush1.msra.mxu0 0.0
        %620 = vmatprep.subr.mxu0 0.0
        %621 = vmatpush1.msra.mxu0 0.0
        %622 = vmatprep.subr.mxu0 0.0
        %623 = vmatpush1.msra.mxu0 0.0
        %624 = vmatprep.subr.mxu0 0.0
        %625 = vmatpush1.msra.mxu0 0.0
        %626 = vmatprep.subr.mxu0 0.0
        %627 = vmatpush1.msra.mxu0 0.0
        %628 = vmatprep.subr.mxu0 0.0
        %629 = vmatpush1.msra.mxu0 0.0
        %630 = vmatprep.subr.mxu0 0.0
        %631 = vmatpush1.msra.mxu0 0.0
        %632 = vmatprep.subr.mxu0 0.0
        %633 = vmatpush1.msra.mxu0 0.0
        %634 = vmatprep.subr.mxu0 0.0
        %635 = vmatpush1.msra.mxu0 0.0
        %636 = vmatprep.subr.mxu0 0.0
        %637 = vmatpush1.msra.mxu0 0.0
        %638 = vmatprep.subr.mxu0 0.0
        %639 = vmatpush1.msra.mxu0 0.0
        %640 = vmatprep.mubr.f32.mxu0 0.0
        %641 = vmatmul.mubr.f32.gmra.mrb[0].mxu0 %v574
        %v642 = vpop.f32.mrb[0].mxu0
        %v643 = vadd.f32 0.0, %v642
        %v644 = vpop.f32.mrb[0].mxu0
        %645 = vdwg.mxu0
        %v646 = vld [vmem:[%s3] sm:$0xff]
        %v648 = vsel %vm485, %v643, 0
        %650 = vmatprep.subr.mxu0 0.0
        %651 = vmatpush1.msra.mxu0 %v646
        %652 = vmatprep.subr.mxu0 0.0
        %653 = vmatpush1.msra.mxu0 0.0
        %654 = vmatprep.subr.mxu0 0.0
        %655 = vmatpush1.msra.mxu0 0.0
        %656 = vmatprep.subr.mxu0 0.0
        %657 = vmatpush1.msra.mxu0 0.0
        %658 = vmatprep.subr.mxu0 0.0
        %659 = vmatpush1.msra.mxu0 0.0
        %660 = vmatprep.subr.mxu0 0.0
        %661 = vmatpush1.msra.mxu0 0.0
        %662 = vmatprep.subr.mxu0 0.0
        %663 = vmatpush1.msra.mxu0 0.0
        %664 = vmatprep.subr.mxu0 0.0
        %665 = vmatpush1.msra.mxu0 0.0
        %666 = vmatprep.subr.mxu0 0.0
        %667 = vmatpush1.msra.mxu0 0.0
        %668 = vmatprep.subr.mxu0 0.0
        %669 = vmatpush1.msra.mxu0 0.0
        %670 = vmatprep.subr.mxu0 0.0
        %671 = vmatpush1.msra.mxu0 0.0
        %672 = vmatprep.subr.mxu0 0.0
        %673 = vmatpush1.msra.mxu0 0.0
        %674 = vmatprep.subr.mxu0 0.0
        %675 = vmatpush1.msra.mxu0 0.0
        %676 = vmatprep.subr.mxu0 0.0
        %677 = vmatpush1.msra.mxu0 0.0
        %678 = vmatprep.subr.mxu0 0.0
        %679 = vmatpush1.msra.mxu0 0.0
        %680 = vmatprep.subr.mxu0 0.0
        %681 = vmatpush1.msra.mxu0 0.0
        %682 = vmatprep.subr.mxu0 0.0
        %683 = vmatpush1.msra.mxu0 0.0
        %684 = vmatprep.subr.mxu0 0.0
        %685 = vmatpush1.msra.mxu0 0.0
        %686 = vmatprep.subr.mxu0 0.0
        %687 = vmatpush1.msra.mxu0 0.0
        %688 = vmatprep.subr.mxu0 0.0
        %689 = vmatpush1.msra.mxu0 0.0
        %690 = vmatprep.subr.mxu0 0.0
        %691 = vmatpush1.msra.mxu0 0.0
        %692 = vmatprep.subr.mxu0 0.0
        %693 = vmatpush1.msra.mxu0 0.0
        %694 = vmatprep.subr.mxu0 0.0
        %695 = vmatpush1.msra.mxu0 0.0
        %696 = vmatprep.subr.mxu0 0.0
        %697 = vmatpush1.msra.mxu0 0.0
        %698 = vmatprep.subr.mxu0 0.0
        %699 = vmatpush1.msra.mxu0 0.0
        %700 = vmatprep.subr.mxu0 0.0
        %701 = vmatpush1.msra.mxu0 0.0
        %702 = vmatprep.subr.mxu0 0.0
        %703 = vmatpush1.msra.mxu0 0.0
        %704 = vmatprep.subr.mxu0 0.0
        %705 = vmatpush1.msra.mxu0 0.0
        %706 = vmatprep.subr.mxu0 0.0
        %707 = vmatpush1.msra.mxu0 0.0
        %708 = vmatprep.subr.mxu0 0.0
        %709 = vmatpush1.msra.mxu0 0.0
        %710 = vmatprep.subr.mxu0 0.0
        %711 = vmatpush1.msra.mxu0 0.0
        %712 = vmatprep.subr.mxu0 0.0
        %713 = vmatpush1.msra.mxu0 0.0
        %714 = vmatprep.mubr.f32.mxu0 0.0
        %715 = vmatmul.mubr.f32.gmra.mrb[0].mxu0 %v648
        %v716 = vpop.f32.mrb[0].mxu0
        %v717 = vadd.f32 0.0, %v716
        %v718 = vpop.f32.mrb[0].mxu0
        %719 = vdwg.mxu0
        %v720 = vadd.f32 %v232, %v717
        %s721 = scalar_lea.vmem %s1, 96
        %v722 = vld [vmem:[%s721] sm:$0xff]
        %v723 = vld [vmem:[%s721 + $0x8] sm:$0xff]
        %v724 = vld [vmem:[%s721 + $0x10] sm:$0xff]
        %v725 = vld [vmem:[%s721 + $0x18] sm:$0xff]
        %s726 = scalar_lea.vmem %s2, 3
        %v727 = vld [vmem:[%s726] sm:$0x1]
        %v729 = vlaneseq
        %v730 = vshrl.u32 %v729, 7
        %v731 = vsub.s32 0, %v730
        %v732 = vrot.slane %v727, %v731
        %734 = vmatprep.subr.mxu0 0.0
        %735 = vmatpush1.msra.mxu0 %v722
        %736 = vmatprep.subr.mxu0 0.0
        %737 = vmatpush1.msra.mxu0 %v723
        %738 = vmatprep.subr.mxu0 0.0
        %739 = vmatpush1.msra.mxu0 %v724
        %740 = vmatprep.subr.mxu0 0.0
        %741 = vmatpush1.msra.mxu0 %v725
        %742 = vmatprep.subr.mxu0 0.0
        %743 = vmatpush1.msra.mxu0 0.0
        %744 = vmatprep.subr.mxu0 0.0
        %745 = vmatpush1.msra.mxu0 0.0
        %746 = vmatprep.subr.mxu0 0.0
        %747 = vmatpush1.msra.mxu0 0.0
        %748 = vmatprep.subr.mxu0 0.0
        %749 = vmatpush1.msra.mxu0 0.0
        %750 = vmatprep.subr.mxu0 0.0
        %751 = vmatpush1.msra.mxu0 0.0
        %752 = vmatprep.subr.mxu0 0.0
        %753 = vmatpush1.msra.mxu0 0.0
        %754 = vmatprep.subr.mxu0 0.0
        %755 = vmatpush1.msra.mxu0 0.0
        %756 = vmatprep.subr.mxu0 0.0
        %757 = vmatpush1.msra.mxu0 0.0
        %758 = vmatprep.subr.mxu0 0.0
        %759 = vmatpush1.msra.mxu0 0.0
        %760 = vmatprep.subr.mxu0 0.0
        %761 = vmatpush1.msra.mxu0 0.0
        %762 = vmatprep.subr.mxu0 0.0
        %763 = vmatpush1.msra.mxu0 0.0
        %764 = vmatprep.subr.mxu0 0.0
        %765 = vmatpush1.msra.mxu0 0.0
        %766 = vmatprep.subr.mxu0 0.0
        %767 = vmatpush1.msra.mxu0 0.0
        %768 = vmatprep.subr.mxu0 0.0
        %769 = vmatpush1.msra.mxu0 0.0
        %770 = vmatprep.subr.mxu0 0.0
        %771 = vmatpush1.msra.mxu0 0.0
        %772 = vmatprep.subr.mxu0 0.0
        %773 = vmatpush1.msra.mxu0 0.0
        %774 = vmatprep.subr.mxu0 0.0
        %775 = vmatpush1.msra.mxu0 0.0
        %776 = vmatprep.subr.mxu0 0.0
        %777 = vmatpush1.msra.mxu0 0.0
        %778 = vmatprep.subr.mxu0 0.0
        %779 = vmatpush1.msra.mxu0 0.0
        %780 = vmatprep.subr.mxu0 0.0
        %781 = vmatpush1.msra.mxu0 0.0
        %782 = vmatprep.subr.mxu0 0.0
        %783 = vmatpush1.msra.mxu0 0.0
        %784 = vmatprep.subr.mxu0 0.0
        %785 = vmatpush1.msra.mxu0 0.0
        %786 = vmatprep.subr.mxu0 0.0
        %787 = vmatpush1.msra.mxu0 0.0
        %788 = vmatprep.subr.mxu0 0.0
        %789 = vmatpush1.msra.mxu0 0.0
        %790 = vmatprep.subr.mxu0 0.0
        %791 = vmatpush1.msra.mxu0 0.0
        %792 = vmatprep.subr.mxu0 0.0
        %793 = vmatpush1.msra.mxu0 0.0
        %794 = vmatprep.subr.mxu0 0.0
        %795 = vmatpush1.msra.mxu0 0.0
        %796 = vmatprep.subr.mxu0 0.0
        %797 = vmatpush1.msra.mxu0 0.0
        %798 = vmatprep.mubr.f32.mxu0 0.0
        %799 = vmatmul.mubr.f32.gmra.mrb[0].mxu0 %v247
        %v800 = vpop.f32.mrb[0].mxu0
        %v801 = vadd.f32 %v732, %v800
        %v802 = vpop.f32.mrb[0].mxu0
        %803 = vdwg.mxu0
        %s804 = scalar_lea.vmem %s1, 128
        %v805 = vld [vmem:[%s804] sm:$0xff]
        %v806 = vld [vmem:[%s804 + $0x8] sm:$0xff]
        %v807 = vld [vmem:[%s804 + $0x10] sm:$0xff]
        %v808 = vld [vmem:[%s804 + $0x18] sm:$0xff]
        %s809 = scalar_lea.vmem %s2, 4
        %v810 = vld [vmem:[%s809] sm:$0x1]
        %v812 = vlaneseq
        %v813 = vshrl.u32 %v812, 7
        %v814 = vsub.s32 0, %v813
        %v815 = vrot.slane %v810, %v814
        %817 = vmatprep.subr.mxu0 0.0
        %818 = vmatpush1.msra.mxu0 %v805
        %819 = vmatprep.subr.mxu0 0.0
        %820 = vmatpush1.msra.mxu0 %v806
        %821 = vmatprep.subr.mxu0 0.0
        %822 = vmatpush1.msra.mxu0 %v807
        %823 = vmatprep.subr.mxu0 0.0
        %824 = vmatpush1.msra.mxu0 %v808
        %825 = vmatprep.subr.mxu0 0.0
        %826 = vmatpush1.msra.mxu0 0.0
        %827 = vmatprep.subr.mxu0 0.0
        %828 = vmatpush1.msra.mxu0 0.0
        %829 = vmatprep.subr.mxu0 0.0
        %830 = vmatpush1.msra.mxu0 0.0
        %831 = vmatprep.subr.mxu0 0.0
        %832 = vmatpush1.msra.mxu0 0.0
        %833 = vmatprep.subr.mxu0 0.0
        %834 = vmatpush1.msra.mxu0 0.0
        %835 = vmatprep.subr.mxu0 0.0
        %836 = vmatpush1.msra.mxu0 0.0
        %837 = vmatprep.subr.mxu0 0.0
        %838 = vmatpush1.msra.mxu0 0.0
        %839 = vmatprep.subr.mxu0 0.0
        %840 = vmatpush1.msra.mxu0 0.0
        %841 = vmatprep.subr.mxu0 0.0
        %842 = vmatpush1.msra.mxu0 0.0
        %843 = vmatprep.subr.mxu0 0.0
        %844 = vmatpush1.msra.mxu0 0.0
        %845 = vmatprep.subr.mxu0 0.0
        %846 = vmatpush1.msra.mxu0 0.0
        %847 = vmatprep.subr.mxu0 0.0
        %848 = vmatpush1.msra.mxu0 0.0
        %849 = vmatprep.subr.mxu0 0.0
        %850 = vmatpush1.msra.mxu0 0.0
        %851 = vmatprep.subr.mxu0 0.0
        %852 = vmatpush1.msra.mxu0 0.0
        %853 = vmatprep.subr.mxu0 0.0
        %854 = vmatpush1.msra.mxu0 0.0
        %855 = vmatprep.subr.mxu0 0.0
        %856 = vmatpush1.msra.mxu0 0.0
        %857 = vmatprep.subr.mxu0 0.0
        %858 = vmatpush1.msra.mxu0 0.0
        %859 = vmatprep.subr.mxu0 0.0
        %860 = vmatpush1.msra.mxu0 0.0
        %861 = vmatprep.subr.mxu0 0.0
        %862 = vmatpush1.msra.mxu0 0.0
        %863 = vmatprep.subr.mxu0 0.0
        %864 = vmatpush1.msra.mxu0 0.0
        %865 = vmatprep.subr.mxu0 0.0
        %866 = vmatpush1.msra.mxu0 0.0
        %867 = vmatprep.subr.mxu0 0.0
        %868 = vmatpush1.msra.mxu0 0.0
        %869 = vmatprep.subr.mxu0 0.0
        %870 = vmatpush1.msra.mxu0 0.0
        %871 = vmatprep.subr.mxu0 0.0
        %872 = vmatpush1.msra.mxu0 0.0
        %873 = vmatprep.subr.mxu0 0.0
        %874 = vmatpush1.msra.mxu0 0.0
        %875 = vmatprep.subr.mxu0 0.0
        %876 = vmatpush1.msra.mxu0 0.0
        %877 = vmatprep.subr.mxu0 0.0
        %878 = vmatpush1.msra.mxu0 0.0
        %879 = vmatprep.subr.mxu0 0.0
        %880 = vmatpush1.msra.mxu0 0.0
        %881 = vmatprep.mubr.f32.mxu0 0.0
        %882 = vmatmul.mubr.f32.gmra.mrb[0].mxu0 %v247
        %v883 = vpop.f32.mrb[0].mxu0
        %v884 = vadd.f32 %v815, %v883
        %v885 = vpop.f32.mrb[0].mxu0
        %886 = vdwg.mxu0
        %s887 = scalar_lea.vmem %s1, 160
        %v888 = vld [vmem:[%s887] sm:$0xff]
        %v889 = vld [vmem:[%s887 + $0x8] sm:$0xff]
        %v890 = vld [vmem:[%s887 + $0x10] sm:$0xff]
        %v891 = vld [vmem:[%s887 + $0x18] sm:$0xff]
        %s892 = scalar_lea.vmem %s2, 5
        %v893 = vld [vmem:[%s892] sm:$0x1]
        %v895 = vlaneseq
        %v896 = vshrl.u32 %v895, 7
        %v897 = vsub.s32 0, %v896
        %v898 = vrot.slane %v893, %v897
        %900 = vmatprep.subr.mxu0 0.0
        %901 = vmatpush1.msra.mxu0 %v888
        %902 = vmatprep.subr.mxu0 0.0
        %903 = vmatpush1.msra.mxu0 %v889
        %904 = vmatprep.subr.mxu0 0.0
        %905 = vmatpush1.msra.mxu0 %v890
        %906 = vmatprep.subr.mxu0 0.0
        %907 = vmatpush1.msra.mxu0 %v891
        %908 = vmatprep.subr.mxu0 0.0
        %909 = vmatpush1.msra.mxu0 0.0
        %910 = vmatprep.subr.mxu0 0.0
        %911 = vmatpush1.msra.mxu0 0.0
        %912 = vmatprep.subr.mxu0 0.0
        %913 = vmatpush1.msra.mxu0 0.0
        %914 = vmatprep.subr.mxu0 0.0
        %915 = vmatpush1.msra.mxu0 0.0
        %916 = vmatprep.subr.mxu0 0.0
        %917 = vmatpush1.msra.mxu0 0.0
        %918 = vmatprep.subr.mxu0 0.0
        %919 = vmatpush1.msra.mxu0 0.0
        %920 = vmatprep.subr.mxu0 0.0
        %921 = vmatpush1.msra.mxu0 0.0
        %922 = vmatprep.subr.mxu0 0.0
        %923 = vmatpush1.msra.mxu0 0.0
        %924 = vmatprep.subr.mxu0 0.0
        %925 = vmatpush1.msra.mxu0 0.0
        %926 = vmatprep.subr.mxu0 0.0
        %927 = vmatpush1.msra.mxu0 0.0
        %928 = vmatprep.subr.mxu0 0.0
        %929 = vmatpush1.msra.mxu0 0.0
        %930 = vmatprep.subr.mxu0 0.0
        %931 = vmatpush1.msra.mxu0 0.0
        %932 = vmatprep.subr.mxu0 0.0
        %933 = vmatpush1.msra.mxu0 0.0
        %934 = vmatprep.subr.mxu0 0.0
        %935 = vmatpush1.msra.mxu0 0.0
        %936 = vmatprep.subr.mxu0 0.0
        %937 = vmatpush1.msra.mxu0 0.0
        %938 = vmatprep.subr.mxu0 0.0
        %939 = vmatpush1.msra.mxu0 0.0
        %940 = vmatprep.subr.mxu0 0.0
        %941 = vmatpush1.msra.mxu0 0.0
        %942 = vmatprep.subr.mxu0 0.0
        %943 = vmatpush1.msra.mxu0 0.0
        %944 = vmatprep.subr.mxu0 0.0
        %945 = vmatpush1.msra.mxu0 0.0
        %946 = vmatprep.subr.mxu0 0.0
        %947 = vmatpush1.msra.mxu0 0.0
        %948 = vmatprep.subr.mxu0 0.0
        %949 = vmatpush1.msra.mxu0 0.0
        %950 = vmatprep.subr.mxu0 0.0
        %951 = vmatpush1.msra.mxu0 0.0
        %952 = vmatprep.subr.mxu0 0.0
        %953 = vmatpush1.msra.mxu0 0.0
        %954 = vmatprep.subr.mxu0 0.0
        %955 = vmatpush1.msra.mxu0 0.0
        %956 = vmatprep.subr.mxu0 0.0
        %957 = vmatpush1.msra.mxu0 0.0
        %958 = vmatprep.subr.mxu0 0.0
        %959 = vmatpush1.msra.mxu0 0.0
        %960 = vmatprep.subr.mxu0 0.0
        %961 = vmatpush1.msra.mxu0 0.0
        %962 = vmatprep.subr.mxu0 0.0
        %963 = vmatpush1.msra.mxu0 0.0
        %964 = vmatprep.mubr.f32.mxu0 0.0
        %965 = vmatmul.mubr.f32.gmra.mrb[0].mxu0 %v247
        %v966 = vpop.f32.mrb[0].mxu0
        %v967 = vadd.f32 %v898, %v966
        %v968 = vpop.f32.mrb[0].mxu0
        %969 = vdwg.mxu0
        %v971 = vsel %vm485, %v801, 0
        %v974 = vsel %vm485, %v884, 0
        %976 = vmatprep.subr.mxu0 0.0
        %977 = vmatpush1.xpose.msra.mxu0 %v974
        %978 = vmatprep.subr.mxu0 0.0
        %979 = vmatpush1.xpose.msra.mxu0 0.0
        %980 = vmatprep.subr.mxu0 0.0
        %981 = vmatpush1.xpose.msra.mxu0 0.0
        %982 = vmatprep.subr.mxu0 0.0
        %983 = vmatpush1.xpose.msra.mxu0 0.0
        %984 = vmatprep.subr.mxu0 0.0
        %985 = vmatpush1.xpose.msra.mxu0 0.0
        %986 = vmatprep.subr.mxu0 0.0
        %987 = vmatpush1.xpose.msra.mxu0 0.0
        %988 = vmatprep.subr.mxu0 0.0
        %989 = vmatpush1.xpose.msra.mxu0 0.0
        %990 = vmatprep.subr.mxu0 0.0
        %991 = vmatpush1.xpose.msra.mxu0 0.0
        %992 = vmatprep.subr.mxu0 0.0
        %993 = vmatpush1.xpose.msra.mxu0 0.0
        %994 = vmatprep.subr.mxu0 0.0
        %995 = vmatpush1.xpose.msra.mxu0 0.0
        %996 = vmatprep.subr.mxu0 0.0
        %997 = vmatpush1.xpose.msra.mxu0 0.0
        %998 = vmatprep.subr.mxu0 0.0
        %999 = vmatpush1.xpose.msra.mxu0 0.0
        %1000 = vmatprep.subr.mxu0 0.0
        %1001 = vmatpush1.xpose.msra.mxu0 0.0
        %1002 = vmatprep.subr.mxu0 0.0
        %1003 = vmatpush1.xpose.msra.mxu0 0.0
        %1004 = vmatprep.subr.mxu0 0.0
        %1005 = vmatpush1.xpose.msra.mxu0 0.0
        %1006 = vmatprep.subr.mxu0 0.0
        %1007 = vmatpush1.xpose.msra.mxu0 0.0
        %1008 = vmatprep.subr.mxu0 0.0
        %1009 = vmatpush1.xpose.msra.mxu0 0.0
        %1010 = vmatprep.subr.mxu0 0.0
        %1011 = vmatpush1.xpose.msra.mxu0 0.0
        %1012 = vmatprep.subr.mxu0 0.0
        %1013 = vmatpush1.xpose.msra.mxu0 0.0
        %1014 = vmatprep.subr.mxu0 0.0
        %1015 = vmatpush1.xpose.msra.mxu0 0.0
        %1016 = vmatprep.subr.mxu0 0.0
        %1017 = vmatpush1.xpose.msra.mxu0 0.0
        %1018 = vmatprep.subr.mxu0 0.0
        %1019 = vmatpush1.xpose.msra.mxu0 0.0
        %1020 = vmatprep.subr.mxu0 0.0
        %1021 = vmatpush1.xpose.msra.mxu0 0.0
        %1022 = vmatprep.subr.mxu0 0.0
        %1023 = vmatpush1.xpose.msra.mxu0 0.0
        %1024 = vmatprep.subr.mxu0 0.0
        %1025 = vmatpush1.xpose.msra.mxu0 0.0
        %1026 = vmatprep.subr.mxu0 0.0
        %1027 = vmatpush1.xpose.msra.mxu0 0.0
        %1028 = vmatprep.subr.mxu0 0.0
        %1029 = vmatpush1.xpose.msra.mxu0 0.0
        %1030 = vmatprep.subr.mxu0 0.0
        %1031 = vmatpush1.xpose.msra.mxu0 0.0
        %1032 = vmatprep.subr.mxu0 0.0
        %1033 = vmatpush1.xpose.msra.mxu0 0.0
        %1034 = vmatprep.subr.mxu0 0.0
        %1035 = vmatpush1.xpose.msra.mxu0 0.0
        %1036 = vmatprep.subr.mxu0 0.0
        %1037 = vmatpush1.xpose.msra.mxu0 0.0
        %1038 = vmatprep.subr.mxu0 0.0
        %1039 = vmatpush1.xpose.msra.mxu0 0.0
        %1040 = vmatprep.mubr.f32.mxu0 0.0
        %1041 = vmatmul.mubr.f32.gmra.mrb[0].mxu0 %v971
        %v1042 = vpop.f32.mrb[0].mxu0
        %v1043 = vadd.f32 %v226, %v1042
        %v1044 = vpop.f32.mrb[0].mxu0
        %1045 = vdwg.mxu0
        %v1046 = vsel %vm485, %v1043, -inf
        %1047 = vmax.xlane.f32.xlu0 %v1046
        %v1048 = vpop.xlane.xlu0 %1047
        %v1049 = vsub.f32 %v1043, %v1048
        %v1050 = vmul.f32 %v1049, 1.442695
        %v1051 = vpow.pop %v1050
        %v1052 = vsel %vm485, %v1051, 0.0
        %1053 = vadd.xlane.f32.xlu0 %v1052
        %v1054 = vpop.xlane.xlu0 %1053
        %v1055 = vrcp.pop %v1054
        %v1056 = vmul.f32 %v1051, %v1055
        %v1058 = vsel %vm485, %v1056, 0
        %1060 = vmatprep.subr.mxu0 0.0
        %1061 = vmatpush1.msra.mxu0 %v967
        %1062 = vmatprep.subr.mxu0 0.0
        %1063 = vmatpush1.msra.mxu0 0.0
        %1064 = vmatprep.subr.mxu0 0.0
        %1065 = vmatpush1.msra.mxu0 0.0
        %1066 = vmatprep.subr.mxu0 0.0
        %1067 = vmatpush1.msra.mxu0 0.0
        %1068 = vmatprep.subr.mxu0 0.0
        %1069 = vmatpush1.msra.mxu0 0.0
        %1070 = vmatprep.subr.mxu0 0.0
        %1071 = vmatpush1.msra.mxu0 0.0
        %1072 = vmatprep.subr.mxu0 0.0
        %1073 = vmatpush1.msra.mxu0 0.0
        %1074 = vmatprep.subr.mxu0 0.0
        %1075 = vmatpush1.msra.mxu0 0.0
        %1076 = vmatprep.subr.mxu0 0.0
        %1077 = vmatpush1.msra.mxu0 0.0
        %1078 = vmatprep.subr.mxu0 0.0
        %1079 = vmatpush1.msra.mxu0 0.0
        %1080 = vmatprep.subr.mxu0 0.0
        %1081 = vmatpush1.msra.mxu0 0.0
        %1082 = vmatprep.subr.mxu0 0.0
        %1083 = vmatpush1.msra.mxu0 0.0
        %1084 = vmatprep.subr.mxu0 0.0
        %1085 = vmatpush1.msra.mxu0 0.0
        %1086 = vmatprep.subr.mxu0 0.0
        %1087 = vmatpush1.msra.mxu0 0.0
        %1088 = vmatprep.subr.mxu0 0.0
        %1089 = vmatpush1.msra.mxu0 0.0
        %1090 = vmatprep.subr.mxu0 0.0
        %1091 = vmatpush1.msra.mxu0 0.0
        %1092 = vmatprep.subr.mxu0 0.0
        %1093 = vmatpush1.msra.mxu0 0.0
        %1094 = vmatprep.subr.mxu0 0.0
        %1095 = vmatpush1.msra.mxu0 0.0
        %1096 = vmatprep.subr.mxu0 0.0
        %1097 = vmatpush1.msra.mxu0 0.0
        %1098 = vmatprep.subr.mxu0 0.0
        %1099 = vmatpush1.msra.mxu0 0.0
        %1100 = vmatprep.subr.mxu0 0.0
        %1101 = vmatpush1.msra.mxu0 0.0
        %1102 = vmatprep.subr.mxu0 0.0
        %1103 = vmatpush1.msra.mxu0 0.0
        %1104 = vmatprep.subr.mxu0 0.0
        %1105 = vmatpush1.msra.mxu0 0.0
        %1106 = vmatprep.subr.mxu0 0.0
        %1107 = vmatpush1.msra.mxu0 0.0
        %1108 = vmatprep.subr.mxu0 0.0
        %1109 = vmatpush1.msra.mxu0 0.0
        %1110 = vmatprep.subr.mxu0 0.0
        %1111 = vmatpush1.msra.mxu0 0.0
        %1112 = vmatprep.subr.mxu0 0.0
        %1113 = vmatpush1.msra.mxu0 0.0
        %1114 = vmatprep.subr.mxu0 0.0
        %1115 = vmatpush1.msra.mxu0 0.0
        %1116 = vmatprep.subr.mxu0 0.0
        %1117 = vmatpush1.msra.mxu0 0.0
        %1118 = vmatprep.subr.mxu0 0.0
        %1119 = vmatpush1.msra.mxu0 0.0
        %1120 = vmatprep.subr.mxu0 0.0
        %1121 = vmatpush1.msra.mxu0 0.0
        %1122 = vmatprep.subr.mxu0 0.0
        %1123 = vmatpush1.msra.mxu0 0.0
        %1124 = vmatprep.mubr.f32.mxu0 0.0
        %1125 = vmatmul.mubr.f32.gmra.mrb[0].mxu0 %v1058
        %v1126 = vpop.f32.mrb[0].mxu0
        %v1127 = vadd.f32 0.0, %v1126
        %v1128 = vpop.f32.mrb[0].mxu0
        %1129 = vdwg.mxu0
        %s1130 = scalar_lea.vmem %s3, 8
        %v1131 = vld [vmem:[%s1130] sm:$0xff]
        %v1133 = vsel %vm485, %v1127, 0
        %1135 = vmatprep.subr.mxu0 0.0
        %1136 = vmatpush1.msra.mxu0 %v1131
        %1137 = vmatprep.subr.mxu0 0.0
        %1138 = vmatpush1.msra.mxu0 0.0
        %1139 = vmatprep.subr.mxu0 0.0
        %1140 = vmatpush1.msra.mxu0 0.0
        %1141 = vmatprep.subr.mxu0 0.0
        %1142 = vmatpush1.msra.mxu0 0.0
        %1143 = vmatprep.subr.mxu0 0.0
        %1144 = vmatpush1.msra.mxu0 0.0
        %1145 = vmatprep.subr.mxu0 0.0
        %1146 = vmatpush1.msra.mxu0 0.0
        %1147 = vmatprep.subr.mxu0 0.0
        %1148 = vmatpush1.msra.mxu0 0.0
        %1149 = vmatprep.subr.mxu0 0.0
        %1150 = vmatpush1.msra.mxu0 0.0
        %1151 = vmatprep.subr.mxu0 0.0
        %1152 = vmatpush1.msra.mxu0 0.0
        %1153 = vmatprep.subr.mxu0 0.0
        %1154 = vmatpush1.msra.mxu0 0.0
        %1155 = vmatprep.subr.mxu0 0.0
        %1156 = vmatpush1.msra.mxu0 0.0
        %1157 = vmatprep.subr.mxu0 0.0
        %1158 = vmatpush1.msra.mxu0 0.0
        %1159 = vmatprep.subr.mxu0 0.0
        %1160 = vmatpush1.msra.mxu0 0.0
        %1161 = vmatprep.subr.mxu0 0.0
        %1162 = vmatpush1.msra.mxu0 0.0
        %1163 = vmatprep.subr.mxu0 0.0
        %1164 = vmatpush1.msra.mxu0 0.0
        %1165 = vmatprep.subr.mxu0 0.0
        %1166 = vmatpush1.msra.mxu0 0.0
        %1167 = vmatprep.subr.mxu0 0.0
        %1168 = vmatpush1.msra.mxu0 0.0
        %1169 = vmatprep.subr.mxu0 0.0
        %1170 = vmatpush1.msra.mxu0 0.0
        %1171 = vmatprep.subr.mxu0 0.0
        %1172 = vmatpush1.msra.mxu0 0.0
        %1173 = vmatprep.subr.mxu0 0.0
        %1174 = vmatpush1.msra.mxu0 0.0
        %1175 = vmatprep.subr.mxu0 0.0
        %1176 = vmatpush1.msra.mxu0 0.0
        %1177 = vmatprep.subr.mxu0 0.0
        %1178 = vmatpush1.msra.mxu0 0.0
        %1179 = vmatprep.subr.mxu0 0.0
        %1180 = vmatpush1.msra.mxu0 0.0
        %1181 = vmatprep.subr.mxu0 0.0
        %1182 = vmatpush1.msra.mxu0 0.0
        %1183 = vmatprep.subr.mxu0 0.0
        %1184 = vmatpush1.msra.mxu0 0.0
        %1185 = vmatprep.subr.mxu0 0.0
        %1186 = vmatpush1.msra.mxu0 0.0
        %1187 = vmatprep.subr.mxu0 0.0
        %1188 = vmatpush1.msra.mxu0 0.0
        %1189 = vmatprep.subr.mxu0 0.0
        %1190 = vmatpush1.msra.mxu0 0.0
        %1191 = vmatprep.subr.mxu0 0.0
        %1192 = vmatpush1.msra.mxu0 0.0
        %1193 = vmatprep.subr.mxu0 0.0
        %1194 = vmatpush1.msra.mxu0 0.0
        %1195 = vmatprep.subr.mxu0 0.0
        %1196 = vmatpush1.msra.mxu0 0.0
        %1197 = vmatprep.subr.mxu0 0.0
        %1198 = vmatpush1.msra.mxu0 0.0
        %1199 = vmatprep.mubr.f32.mxu0 0.0
        %1200 = vmatmul.mubr.f32.gmra.mrb[0].mxu0 %v1133
        %v1201 = vpop.f32.mrb[0].mxu0
        %v1202 = vadd.f32 0.0, %v1201
        %v1203 = vpop.f32.mrb[0].mxu0
        %1204 = vdwg.mxu0
        %v1205 = vadd.f32 %v720, %v1202
        %s1206 = scalar_lea.vmem %s1, 192
        %v1207 = vld [vmem:[%s1206] sm:$0xff]
        %v1208 = vld [vmem:[%s1206 + $0x8] sm:$0xff]
        %v1209 = vld [vmem:[%s1206 + $0x10] sm:$0xff]
        %v1210 = vld [vmem:[%s1206 + $0x18] sm:$0xff]
        %s1211 = scalar_lea.vmem %s2, 6
        %v1212 = vld [vmem:[%s1211] sm:$0x1]
        %v1214 = vlaneseq
        %v1215 = vshrl.u32 %v1214, 7
        %v1216 = vsub.s32 0, %v1215
        %v1217 = vrot.slane %v1212, %v1216
        %1219 = vmatprep.subr.mxu0 0.0
        %1220 = vmatpush1.msra.mxu0 %v1207
        %1221 = vmatprep.subr.mxu0 0.0
        %1222 = vmatpush1.msra.mxu0 %v1208
        %1223 = vmatprep.subr.mxu0 0.0
        %1224 = vmatpush1.msra.mxu0 %v1209
        %1225 = vmatprep.subr.mxu0 0.0
        %1226 = vmatpush1.msra.mxu0 %v1210
        %1227 = vmatprep.subr.mxu0 0.0
        %1228 = vmatpush1.msra.mxu0 0.0
        %1229 = vmatprep.subr.mxu0 0.0
        %1230 = vmatpush1.msra.mxu0 0.0
        %1231 = vmatprep.subr.mxu0 0.0
        %1232 = vmatpush1.msra.mxu0 0.0
        %1233 = vmatprep.subr.mxu0 0.0
        %1234 = vmatpush1.msra.mxu0 0.0
        %1235 = vmatprep.subr.mxu0 0.0
        %1236 = vmatpush1.msra.mxu0 0.0
        %1237 = vmatprep.subr.mxu0 0.0
        %1238 = vmatpush1.msra.mxu0 0.0
        %1239 = vmatprep.subr.mxu0 0.0
        %1240 = vmatpush1.msra.mxu0 0.0
        %1241 = vmatprep.subr.mxu0 0.0
        %1242 = vmatpush1.msra.mxu0 0.0
        %1243 = vmatprep.subr.mxu0 0.0
        %1244 = vmatpush1.msra.mxu0 0.0
        %1245 = vmatprep.subr.mxu0 0.0
        %1246 = vmatpush1.msra.mxu0 0.0
        %1247 = vmatprep.subr.mxu0 0.0
        %1248 = vmatpush1.msra.mxu0 0.0
        %1249 = vmatprep.subr.mxu0 0.0
        %1250 = vmatpush1.msra.mxu0 0.0
        %1251 = vmatprep.subr.mxu0 0.0
        %1252 = vmatpush1.msra.mxu0 0.0
        %1253 = vmatprep.subr.mxu0 0.0
        %1254 = vmatpush1.msra.mxu0 0.0
        %1255 = vmatprep.subr.mxu0 0.0
        %1256 = vmatpush1.msra.mxu0 0.0
        %1257 = vmatprep.subr.mxu0 0.0
        %1258 = vmatpush1.msra.mxu0 0.0
        %1259 = vmatprep.subr.mxu0 0.0
        %1260 = vmatpush1.msra.mxu0 0.0
        %1261 = vmatprep.subr.mxu0 0.0
        %1262 = vmatpush1.msra.mxu0 0.0
        %1263 = vmatprep.subr.mxu0 0.0
        %1264 = vmatpush1.msra.mxu0 0.0
        %1265 = vmatprep.subr.mxu0 0.0
        %1266 = vmatpush1.msra.mxu0 0.0
        %1267 = vmatprep.subr.mxu0 0.0
        %1268 = vmatpush1.msra.mxu0 0.0
        %1269 = vmatprep.subr.mxu0 0.0
        %1270 = vmatpush1.msra.mxu0 0.0
        %1271 = vmatprep.subr.mxu0 0.0
        %1272 = vmatpush1.msra.mxu0 0.0
        %1273 = vmatprep.subr.mxu0 0.0
        %1274 = vmatpush1.msra.mxu0 0.0
        %1275 = vmatprep.subr.mxu0 0.0
        %1276 = vmatpush1.msra.mxu0 0.0
        %1277 = vmatprep.subr.mxu0 0.0
        %1278 = vmatpush1.msra.mxu0 0.0
        %1279 = vmatprep.subr.mxu0 0.0
        %1280 = vmatpush1.msra.mxu0 0.0
        %1281 = vmatprep.subr.mxu0 0.0
        %1282 = vmatpush1.msra.mxu0 0.0
        %1283 = vmatprep.mubr.f32.mxu0 0.0
        %1284 = vmatmul.mubr.f32.gmra.mrb[0].mxu0 %v247
        %v1285 = vpop.f32.mrb[0].mxu0
        %v1286 = vadd.f32 %v1217, %v1285
        %v1287 = vpop.f32.mrb[0].mxu0
        %1288 = vdwg.mxu0
        %s1289 = scalar_lea.vmem %s1, 224
        %v1290 = vld [vmem:[%s1289] sm:$0xff]
        %v1291 = vld [vmem:[%s1289 + $0x8] sm:$0xff]
        %v1292 = vld [vmem:[%s1289 + $0x10] sm:$0xff]
        %v1293 = vld [vmem:[%s1289 + $0x18] sm:$0xff]
        %s1294 = scalar_lea.vmem %s2, 7
        %v1295 = vld [vmem:[%s1294] sm:$0x1]
        %v1297 = vlaneseq
        %v1298 = vshrl.u32 %v1297, 7
        %v1299 = vsub.s32 0, %v1298
        %v1300 = vrot.slane %v1295, %v1299
        %1302 = vmatprep.subr.mxu0 0.0
        %1303 = vmatpush1.msra.mxu0 %v1290
        %1304 = vmatprep.subr.mxu0 0.0
        %1305 = vmatpush1.msra.mxu0 %v1291
        %1306 = vmatprep.subr.mxu0 0.0
        %1307 = vmatpush1.msra.mxu0 %v1292
        %1308 = vmatprep.subr.mxu0 0.0
        %1309 = vmatpush1.msra.mxu0 %v1293
        %1310 = vmatprep.subr.mxu0 0.0
        %1311 = vmatpush1.msra.mxu0 0.0
        %1312 = vmatprep.subr.mxu0 0.0
        %1313 = vmatpush1.msra.mxu0 0.0
        %1314 = vmatprep.subr.mxu0 0.0
        %1315 = vmatpush1.msra.mxu0 0.0
        %1316 = vmatprep.subr.mxu0 0.0
        %1317 = vmatpush1.msra.mxu0 0.0
        %1318 = vmatprep.subr.mxu0 0.0
        %1319 = vmatpush1.msra.mxu0 0.0
        %1320 = vmatprep.subr.mxu0 0.0
        %1321 = vmatpush1.msra.mxu0 0.0
        %1322 = vmatprep.subr.mxu0 0.0
        %1323 = vmatpush1.msra.mxu0 0.0
        %1324 = vmatprep.subr.mxu0 0.0
        %1325 = vmatpush1.msra.mxu0 0.0
        %1326 = vmatprep.subr.mxu0 0.0
        %1327 = vmatpush1.msra.mxu0 0.0
        %1328 = vmatprep.subr.mxu0 0.0
        %1329 = vmatpush1.msra.mxu0 0.0
        %1330 = vmatprep.subr.mxu0 0.0
        %1331 = vmatpush1.msra.mxu0 0.0
        %1332 = vmatprep.subr.mxu0 0.0
        %1333 = vmatpush1.msra.mxu0 0.0
        %1334 = vmatprep.subr.mxu0 0.0
        %1335 = vmatpush1.msra.mxu0 0.0
        %1336 = vmatprep.subr.mxu0 0.0
        %1337 = vmatpush1.msra.mxu0 0.0
        %1338 = vmatprep.subr.mxu0 0.0
        %1339 = vmatpush1.msra.mxu0 0.0
        %1340 = vmatprep.subr.mxu0 0.0
        %1341 = vmatpush1.msra.mxu0 0.0
        %1342 = vmatprep.subr.mxu0 0.0
        %1343 = vmatpush1.msra.mxu0 0.0
        %1344 = vmatprep.subr.mxu0 0.0
        %1345 = vmatpush1.msra.mxu0 0.0
        %1346 = vmatprep.subr.mxu0 0.0
        %1347 = vmatpush1.msra.mxu0 0.0
        %1348 = vmatprep.subr.mxu0 0.0
        %1349 = vmatpush1.msra.mxu0 0.0
        %1350 = vmatprep.subr.mxu0 0.0
        %1351 = vmatpush1.msra.mxu0 0.0
        %1352 = vmatprep.subr.mxu0 0.0
        %1353 = vmatpush1.msra.mxu0 0.0
        %1354 = vmatprep.subr.mxu0 0.0
        %1355 = vmatpush1.msra.mxu0 0.0
        %1356 = vmatprep.subr.mxu0 0.0
        %1357 = vmatpush1.msra.mxu0 0.0
        %1358 = vmatprep.subr.mxu0 0.0
        %1359 = vmatpush1.msra.mxu0 0.0
        %1360 = vmatprep.subr.mxu0 0.0
        %1361 = vmatpush1.msra.mxu0 0.0
        %1362 = vmatprep.subr.mxu0 0.0
        %1363 = vmatpush1.msra.mxu0 0.0
        %1364 = vmatprep.subr.mxu0 0.0
        %1365 = vmatpush1.msra.mxu0 0.0
        %1366 = vmatprep.mubr.f32.mxu0 0.0
        %1367 = vmatmul.mubr.f32.gmra.mrb[0].mxu0 %v247
        %v1368 = vpop.f32.mrb[0].mxu0
        %v1369 = vadd.f32 %v1300, %v1368
        %v1370 = vpop.f32.mrb[0].mxu0
        %1371 = vdwg.mxu0
        %s1372 = scalar_lea.vmem %s1, 256
        %v1373 = vld [vmem:[%s1372] sm:$0xff]
        %v1374 = vld [vmem:[%s1372 + $0x8] sm:$0xff]
        %v1375 = vld [vmem:[%s1372 + $0x10] sm:$0xff]
        %v1376 = vld [vmem:[%s1372 + $0x18] sm:$0xff]
        %s1377 = scalar_lea.vmem %s2, 8
        %v1378 = vld [vmem:[%s1377] sm:$0x1]
        %v1380 = vlaneseq
        %v1381 = vshrl.u32 %v1380, 7
        %v1382 = vsub.s32 0, %v1381
        %v1383 = vrot.slane %v1378, %v1382
        %1385 = vmatprep.subr.mxu0 0.0
        %1386 = vmatpush1.msra.mxu0 %v1373
        %1387 = vmatprep.subr.mxu0 0.0
        %1388 = vmatpush1.msra.mxu0 %v1374
        %1389 = vmatprep.subr.mxu0 0.0
        %1390 = vmatpush1.msra.mxu0 %v1375
        %1391 = vmatprep.subr.mxu0 0.0
        %1392 = vmatpush1.msra.mxu0 %v1376
        %1393 = vmatprep.subr.mxu0 0.0
        %1394 = vmatpush1.msra.mxu0 0.0
        %1395 = vmatprep.subr.mxu0 0.0
        %1396 = vmatpush1.msra.mxu0 0.0
        %1397 = vmatprep.subr.mxu0 0.0
        %1398 = vmatpush1.msra.mxu0 0.0
        %1399 = vmatprep.subr.mxu0 0.0
        %1400 = vmatpush1.msra.mxu0 0.0
        %1401 = vmatprep.subr.mxu0 0.0
        %1402 = vmatpush1.msra.mxu0 0.0
        %1403 = vmatprep.subr.mxu0 0.0
        %1404 = vmatpush1.msra.mxu0 0.0
        %1405 = vmatprep.subr.mxu0 0.0
        %1406 = vmatpush1.msra.mxu0 0.0
        %1407 = vmatprep.subr.mxu0 0.0
        %1408 = vmatpush1.msra.mxu0 0.0
        %1409 = vmatprep.subr.mxu0 0.0
        %1410 = vmatpush1.msra.mxu0 0.0
        %1411 = vmatprep.subr.mxu0 0.0
        %1412 = vmatpush1.msra.mxu0 0.0
        %1413 = vmatprep.subr.mxu0 0.0
        %1414 = vmatpush1.msra.mxu0 0.0
        %1415 = vmatprep.subr.mxu0 0.0
        %1416 = vmatpush1.msra.mxu0 0.0
        %1417 = vmatprep.subr.mxu0 0.0
        %1418 = vmatpush1.msra.mxu0 0.0
        %1419 = vmatprep.subr.mxu0 0.0
        %1420 = vmatpush1.msra.mxu0 0.0
        %1421 = vmatprep.subr.mxu0 0.0
        %1422 = vmatpush1.msra.mxu0 0.0
        %1423 = vmatprep.subr.mxu0 0.0
        %1424 = vmatpush1.msra.mxu0 0.0
        %1425 = vmatprep.subr.mxu0 0.0
        %1426 = vmatpush1.msra.mxu0 0.0
        %1427 = vmatprep.subr.mxu0 0.0
        %1428 = vmatpush1.msra.mxu0 0.0
        %1429 = vmatprep.subr.mxu0 0.0
        %1430 = vmatpush1.msra.mxu0 0.0
        %1431 = vmatprep.subr.mxu0 0.0
        %1432 = vmatpush1.msra.mxu0 0.0
        %1433 = vmatprep.subr.mxu0 0.0
        %1434 = vmatpush1.msra.mxu0 0.0
        %1435 = vmatprep.subr.mxu0 0.0
        %1436 = vmatpush1.msra.mxu0 0.0
        %1437 = vmatprep.subr.mxu0 0.0
        %1438 = vmatpush1.msra.mxu0 0.0
        %1439 = vmatprep.subr.mxu0 0.0
        %1440 = vmatpush1.msra.mxu0 0.0
        %1441 = vmatprep.subr.mxu0 0.0
        %1442 = vmatpush1.msra.mxu0 0.0
        %1443 = vmatprep.subr.mxu0 0.0
        %1444 = vmatpush1.msra.mxu0 0.0
        %1445 = vmatprep.subr.mxu0 0.0
        %1446 = vmatpush1.msra.mxu0 0.0
        %1447 = vmatprep.subr.mxu0 0.0
        %1448 = vmatpush1.msra.mxu0 0.0
        %1449 = vmatprep.mubr.f32.mxu0 0.0
        %1450 = vmatmul.mubr.f32.gmra.mrb[0].mxu0 %v247
        %v1451 = vpop.f32.mrb[0].mxu0
        %v1452 = vadd.f32 %v1383, %v1451
        %v1453 = vpop.f32.mrb[0].mxu0
        %1454 = vdwg.mxu0
        %v1456 = vsel %vm485, %v1286, 0
        %v1459 = vsel %vm485, %v1369, 0
        %1461 = vmatprep.subr.mxu0 0.0
        %1462 = vmatpush1.xpose.msra.mxu0 %v1459
        %1463 = vmatprep.subr.mxu0 0.0
        %1464 = vmatpush1.xpose.msra.mxu0 0.0
        %1465 = vmatprep.subr.mxu0 0.0
        %1466 = vmatpush1.xpose.msra.mxu0 0.0
        %1467 = vmatprep.subr.mxu0 0.0
        %1468 = vmatpush1.xpose.msra.mxu0 0.0
        %1469 = vmatprep.subr.mxu0 0.0
        %1470 = vmatpush1.xpose.msra.mxu0 0.0
        %1471 = vmatprep.subr.mxu0 0.0
        %1472 = vmatpush1.xpose.msra.mxu0 0.0
        %1473 = vmatprep.subr.mxu0 0.0
        %1474 = vmatpush1.xpose.msra.mxu0 0.0
        %1475 = vmatprep.subr.mxu0 0.0
        %1476 = vmatpush1.xpose.msra.mxu0 0.0
        %1477 = vmatprep.subr.mxu0 0.0
        %1478 = vmatpush1.xpose.msra.mxu0 0.0
        %1479 = vmatprep.subr.mxu0 0.0
        %1480 = vmatpush1.xpose.msra.mxu0 0.0
        %1481 = vmatprep.subr.mxu0 0.0
        %1482 = vmatpush1.xpose.msra.mxu0 0.0
        %1483 = vmatprep.subr.mxu0 0.0
        %1484 = vmatpush1.xpose.msra.mxu0 0.0
        %1485 = vmatprep.subr.mxu0 0.0
        %1486 = vmatpush1.xpose.msra.mxu0 0.0
        %1487 = vmatprep.subr.mxu0 0.0
        %1488 = vmatpush1.xpose.msra.mxu0 0.0
        %1489 = vmatprep.subr.mxu0 0.0
        %1490 = vmatpush1.xpose.msra.mxu0 0.0
        %1491 = vmatprep.subr.mxu0 0.0
        %1492 = vmatpush1.xpose.msra.mxu0 0.0
        %1493 = vmatprep.subr.mxu0 0.0
        %1494 = vmatpush1.xpose.msra.mxu0 0.0
        %1495 = vmatprep.subr.mxu0 0.0
        %1496 = vmatpush1.xpose.msra.mxu0 0.0
        %1497 = vmatprep.subr.mxu0 0.0
        %1498 = vmatpush1.xpose.msra.mxu0 0.0
        %1499 = vmatprep.subr.mxu0 0.0
        %1500 = vmatpush1.xpose.msra.mxu0 0.0
        %1501 = vmatprep.subr.mxu0 0.0
        %1502 = vmatpush1.xpose.msra.mxu0 0.0
        %1503 = vmatprep.subr.mxu0 0.0
        %1504 = vmatpush1.xpose.msra.mxu0 0.0
        %1505 = vmatprep.subr.mxu0 0.0
        %1506 = vmatpush1.xpose.msra.mxu0 0.0
        %1507 = vmatprep.subr.mxu0 0.0
        %1508 = vmatpush1.xpose.msra.mxu0 0.0
        %1509 = vmatprep.subr.mxu0 0.0
        %1510 = vmatpush1.xpose.msra.mxu0 0.0
        %1511 = vmatprep.subr.mxu0 0.0
        %1512 = vmatpush1.xpose.msra.mxu0 0.0
        %1513 = vmatprep.subr.mxu0 0.0
        %1514 = vmatpush1.xpose.msra.mxu0 0.0
        %1515 = vmatprep.subr.mxu0 0.0
        %1516 = vmatpush1.xpose.msra.mxu0 0.0
        %1517 = vmatprep.subr.mxu0 0.0
        %1518 = vmatpush1.xpose.msra.mxu0 0.0
        %1519 = vmatprep.subr.mxu0 0.0
        %1520 = vmatpush1.xpose.msra.mxu0 0.0
        %1521 = vmatprep.subr.mxu0 0.0
        %1522 = vmatpush1.xpose.msra.mxu0 0.0
        %1523 = vmatprep.subr.mxu0 0.0
        %1524 = vmatpush1.xpose.msra.mxu0 0.0
        %1525 = vmatprep.mubr.f32.mxu0 0.0
        %1526 = vmatmul.mubr.f32.gmra.mrb[0].mxu0 %v1456
        %v1527 = vpop.f32.mrb[0].mxu0
        %v1528 = vadd.f32 %v226, %v1527
        %v1529 = vpop.f32.mrb[0].mxu0
        %1530 = vdwg.mxu0
        %v1531 = vsel %vm485, %v1528, -inf
        %1532 = vmax.xlane.f32.xlu0 %v1531
        %v1533 = vpop.xlane.xlu0 %1532
        %v1534 = vsub.f32 %v1528, %v1533
        %v1535 = vmul.f32 %v1534, 1.442695
        %v1536 = vpow.pop %v1535
        %v1537 = vsel %vm485, %v1536, 0.0
        %1538 = vadd.xlane.f32.xlu0 %v1537
        %v1539 = vpop.xlane.xlu0 %1538
        %v1540 = vrcp.pop %v1539
        %v1541 = vmul.f32 %v1536, %v1540
        %v1543 = vsel %vm485, %v1541, 0
        %1545 = vmatprep.subr.mxu0 0.0
        %1546 = vmatpush1.msra.mxu0 %v1452
        %1547 = vmatprep.subr.mxu0 0.0
        %1548 = vmatpush1.msra.mxu0 0.0
        %1549 = vmatprep.subr.mxu0 0.0
        %1550 = vmatpush1.msra.mxu0 0.0
        %1551 = vmatprep.subr.mxu0 0.0
        %1552 = vmatpush1.msra.mxu0 0.0
        %1553 = vmatprep.subr.mxu0 0.0
        %1554 = vmatpush1.msra.mxu0 0.0
        %1555 = vmatprep.subr.mxu0 0.0
        %1556 = vmatpush1.msra.mxu0 0.0
        %1557 = vmatprep.subr.mxu0 0.0
        %1558 = vmatpush1.msra.mxu0 0.0
        %1559 = vmatprep.subr.mxu0 0.0
        %1560 = vmatpush1.msra.mxu0 0.0
        %1561 = vmatprep.subr.mxu0 0.0
        %1562 = vmatpush1.msra.mxu0 0.0
        %1563 = vmatprep.subr.mxu0 0.0
        %1564 = vmatpush1.msra.mxu0 0.0
        %1565 = vmatprep.subr.mxu0 0.0
        %1566 = vmatpush1.msra.mxu0 0.0
        %1567 = vmatprep.subr.mxu0 0.0
        %1568 = vmatpush1.msra.mxu0 0.0
        %1569 = vmatprep.subr.mxu0 0.0
        %1570 = vmatpush1.msra.mxu0 0.0
        %1571 = vmatprep.subr.mxu0 0.0
        %1572 = vmatpush1.msra.mxu0 0.0
        %1573 = vmatprep.subr.mxu0 0.0
        %1574 = vmatpush1.msra.mxu0 0.0
        %1575 = vmatprep.subr.mxu0 0.0
        %1576 = vmatpush1.msra.mxu0 0.0
        %1577 = vmatprep.subr.mxu0 0.0
        %1578 = vmatpush1.msra.mxu0 0.0
        %1579 = vmatprep.subr.mxu0 0.0
        %1580 = vmatpush1.msra.mxu0 0.0
        %1581 = vmatprep.subr.mxu0 0.0
        %1582 = vmatpush1.msra.mxu0 0.0
        %1583 = vmatprep.subr.mxu0 0.0
        %1584 = vmatpush1.msra.mxu0 0.0
        %1585 = vmatprep.subr.mxu0 0.0
        %1586 = vmatpush1.msra.mxu0 0.0
        %1587 = vmatprep.subr.mxu0 0.0
        %1588 = vmatpush1.msra.mxu0 0.0
        %1589 = vmatprep.subr.mxu0 0.0
        %1590 = vmatpush1.msra.mxu0 0.0
        %1591 = vmatprep.subr.mxu0 0.0
        %1592 = vmatpush1.msra.mxu0 0.0
        %1593 = vmatprep.subr.mxu0 0.0
        %1594 = vmatpush1.msra.mxu0 0.0
        %1595 = vmatprep.subr.mxu0 0.0
        %1596 = vmatpush1.msra.mxu0 0.0
        %1597 = vmatprep.subr.mxu0 0.0
        %1598 = vmatpush1.msra.mxu0 0.0
        %1599 = vmatprep.subr.mxu0 0.0
        %1600 = vmatpush1.msra.mxu0 0.0
        %1601 = vmatprep.subr.mxu0 0.0
        %1602 = vmatpush1.msra.mxu0 0.0
        %1603 = vmatprep.subr.mxu0 0.0
        %1604 = vmatpush1.msra.mxu0 0.0
        %1605 = vmatprep.subr.mxu0 0.0
        %1606 = vmatpush1.msra.mxu0 0.0
        %1607 = vmatprep.subr.mxu0 0.0
        %1608 = vmatpush1.msra.mxu0 0.0
        %1609 = vmatprep.mubr.f32.mxu0 0.0
        %1610 = vmatmul.mubr.f32.gmra.mrb[0].mxu0 %v1543
        %v1611 = vpop.f32.mrb[0].mxu0
        %v1612 = vadd.f32 0.0, %v1611
        %v1613 = vpop.f32.mrb[0].mxu0
        %1614 = vdwg.mxu0
        %s1615 = scalar_lea.vmem %s3, 16
        %v1616 = vld [vmem:[%s1615] sm:$0xff]
        %v1618 = vsel %vm485, %v1612, 0
        %1620 = vmatprep.subr.mxu0 0.0
        %1621 = vmatpush1.msra.mxu0 %v1616
        %1622 = vmatprep.subr.mxu0 0.0
        %1623 = vmatpush1.msra.mxu0 0.0
        %1624 = vmatprep.subr.mxu0 0.0
        %1625 = vmatpush1.msra.mxu0 0.0
        %1626 = vmatprep.subr.mxu0 0.0
        %1627 = vmatpush1.msra.mxu0 0.0
        %1628 = vmatprep.subr.mxu0 0.0
        %1629 = vmatpush1.msra.mxu0 0.0
        %1630 = vmatprep.subr.mxu0 0.0
        %1631 = vmatpush1.msra.mxu0 0.0
        %1632 = vmatprep.subr.mxu0 0.0
        %1633 = vmatpush1.msra.mxu0 0.0
        %1634 = vmatprep.subr.mxu0 0.0
        %1635 = vmatpush1.msra.mxu0 0.0
        %1636 = vmatprep.subr.mxu0 0.0
        %1637 = vmatpush1.msra.mxu0 0.0
        %1638 = vmatprep.subr.mxu0 0.0
        %1639 = vmatpush1.msra.mxu0 0.0
        %1640 = vmatprep.subr.mxu0 0.0
        %1641 = vmatpush1.msra.mxu0 0.0
        %1642 = vmatprep.subr.mxu0 0.0
        %1643 = vmatpush1.msra.mxu0 0.0
        %1644 = vmatprep.subr.mxu0 0.0
        %1645 = vmatpush1.msra.mxu0 0.0
        %1646 = vmatprep.subr.mxu0 0.0
        %1647 = vmatpush1.msra.mxu0 0.0
        %1648 = vmatprep.subr.mxu0 0.0
        %1649 = vmatpush1.msra.mxu0 0.0
        %1650 = vmatprep.subr.mxu0 0.0
        %1651 = vmatpush1.msra.mxu0 0.0
        %1652 = vmatprep.subr.mxu0 0.0
        %1653 = vmatpush1.msra.mxu0 0.0
        %1654 = vmatprep.subr.mxu0 0.0
        %1655 = vmatpush1.msra.mxu0 0.0
        %1656 = vmatprep.subr.mxu0 0.0
        %1657 = vmatpush1.msra.mxu0 0.0
        %1658 = vmatprep.subr.mxu0 0.0
        %1659 = vmatpush1.msra.mxu0 0.0
        %1660 = vmatprep.subr.mxu0 0.0
        %1661 = vmatpush1.msra.mxu0 0.0
        %1662 = vmatprep.subr.mxu0 0.0
        %1663 = vmatpush1.msra.mxu0 0.0
        %1664 = vmatprep.subr.mxu0 0.0
        %1665 = vmatpush1.msra.mxu0 0.0
        %1666 = vmatprep.subr.mxu0 0.0
        %1667 = vmatpush1.msra.mxu0 0.0
        %1668 = vmatprep.subr.mxu0 0.0
        %1669 = vmatpush1.msra.mxu0 0.0
        %1670 = vmatprep.subr.mxu0 0.0
        %1671 = vmatpush1.msra.mxu0 0.0
        %1672 = vmatprep.subr.mxu0 0.0
        %1673 = vmatpush1.msra.mxu0 0.0
        %1674 = vmatprep.subr.mxu0 0.0
        %1675 = vmatpush1.msra.mxu0 0.0
        %1676 = vmatprep.subr.mxu0 0.0
        %1677 = vmatpush1.msra.mxu0 0.0
        %1678 = vmatprep.subr.mxu0 0.0
        %1679 = vmatpush1.msra.mxu0 0.0
        %1680 = vmatprep.subr.mxu0 0.0
        %1681 = vmatpush1.msra.mxu0 0.0
        %1682 = vmatprep.subr.mxu0 0.0
        %1683 = vmatpush1.msra.mxu0 0.0
        %1684 = vmatprep.mubr.f32.mxu0 0.0
        %1685 = vmatmul.mubr.f32.gmra.mrb[0].mxu0 %v1618
        %v1686 = vpop.f32.mrb[0].mxu0
        %v1687 = vadd.f32 0.0, %v1686
        %v1688 = vpop.f32.mrb[0].mxu0
        %1689 = vdwg.mxu0
        %v1690 = vadd.f32 %v1205, %v1687
        %s1691 = scalar_lea.vmem %s1, 288
        %v1692 = vld [vmem:[%s1691] sm:$0xff]
        %v1693 = vld [vmem:[%s1691 + $0x8] sm:$0xff]
        %v1694 = vld [vmem:[%s1691 + $0x10] sm:$0xff]
        %v1695 = vld [vmem:[%s1691 + $0x18] sm:$0xff]
        %s1696 = scalar_lea.vmem %s2, 9
        %v1697 = vld [vmem:[%s1696] sm:$0x1]
        %v1699 = vlaneseq
        %v1700 = vshrl.u32 %v1699, 7
        %v1701 = vsub.s32 0, %v1700
        %v1702 = vrot.slane %v1697, %v1701
        %1704 = vmatprep.subr.mxu0 0.0
        %1705 = vmatpush1.msra.mxu0 %v1692
        %1706 = vmatprep.subr.mxu0 0.0
        %1707 = vmatpush1.msra.mxu0 %v1693
        %1708 = vmatprep.subr.mxu0 0.0
        %1709 = vmatpush1.msra.mxu0 %v1694
        %1710 = vmatprep.subr.mxu0 0.0
        %1711 = vmatpush1.msra.mxu0 %v1695
        %1712 = vmatprep.subr.mxu0 0.0
        %1713 = vmatpush1.msra.mxu0 0.0
        %1714 = vmatprep.subr.mxu0 0.0
        %1715 = vmatpush1.msra.mxu0 0.0
        %1716 = vmatprep.subr.mxu0 0.0
        %1717 = vmatpush1.msra.mxu0 0.0
        %1718 = vmatprep.subr.mxu0 0.0
        %1719 = vmatpush1.msra.mxu0 0.0
        %1720 = vmatprep.subr.mxu0 0.0
        %1721 = vmatpush1.msra.mxu0 0.0
        %1722 = vmatprep.subr.mxu0 0.0
        %1723 = vmatpush1.msra.mxu0 0.0
        %1724 = vmatprep.subr.mxu0 0.0
        %1725 = vmatpush1.msra.mxu0 0.0
        %1726 = vmatprep.subr.mxu0 0.0
        %1727 = vmatpush1.msra.mxu0 0.0
        %1728 = vmatprep.subr.mxu0 0.0
        %1729 = vmatpush1.msra.mxu0 0.0
        %1730 = vmatprep.subr.mxu0 0.0
        %1731 = vmatpush1.msra.mxu0 0.0
        %1732 = vmatprep.subr.mxu0 0.0
        %1733 = vmatpush1.msra.mxu0 0.0
        %1734 = vmatprep.subr.mxu0 0.0
        %1735 = vmatpush1.msra.mxu0 0.0
        %1736 = vmatprep.subr.mxu0 0.0
        %1737 = vmatpush1.msra.mxu0 0.0
        %1738 = vmatprep.subr.mxu0 0.0
        %1739 = vmatpush1.msra.mxu0 0.0
        %1740 = vmatprep.subr.mxu0 0.0
        %1741 = vmatpush1.msra.mxu0 0.0
        %1742 = vmatprep.subr.mxu0 0.0
        %1743 = vmatpush1.msra.mxu0 0.0
        %1744 = vmatprep.subr.mxu0 0.0
        %1745 = vmatpush1.msra.mxu0 0.0
        %1746 = vmatprep.subr.mxu0 0.0
        %1747 = vmatpush1.msra.mxu0 0.0
        %1748 = vmatprep.subr.mxu0 0.0
        %1749 = vmatpush1.msra.mxu0 0.0
        %1750 = vmatprep.subr.mxu0 0.0
        %1751 = vmatpush1.msra.mxu0 0.0
        %1752 = vmatprep.subr.mxu0 0.0
        %1753 = vmatpush1.msra.mxu0 0.0
        %1754 = vmatprep.subr.mxu0 0.0
        %1755 = vmatpush1.msra.mxu0 0.0
        %1756 = vmatprep.subr.mxu0 0.0
        %1757 = vmatpush1.msra.mxu0 0.0
        %1758 = vmatprep.subr.mxu0 0.0
        %1759 = vmatpush1.msra.mxu0 0.0
        %1760 = vmatprep.subr.mxu0 0.0
        %1761 = vmatpush1.msra.mxu0 0.0
        %1762 = vmatprep.subr.mxu0 0.0
        %1763 = vmatpush1.msra.mxu0 0.0
        %1764 = vmatprep.subr.mxu0 0.0
        %1765 = vmatpush1.msra.mxu0 0.0
        %1766 = vmatprep.subr.mxu0 0.0
        %1767 = vmatpush1.msra.mxu0 0.0
        %1768 = vmatprep.mubr.f32.mxu0 0.0
        %1769 = vmatmul.mubr.f32.gmra.mrb[0].mxu0 %v247
        %v1770 = vpop.f32.mrb[0].mxu0
        %v1771 = vadd.f32 %v1702, %v1770
        %v1772 = vpop.f32.mrb[0].mxu0
        %1773 = vdwg.mxu0
        %s1774 = scalar_lea.vmem %s1, 320
        %v1775 = vld [vmem:[%s1774] sm:$0xff]
        %v1776 = vld [vmem:[%s1774 + $0x8] sm:$0xff]
        %v1777 = vld [vmem:[%s1774 + $0x10] sm:$0xff]
        %v1778 = vld [vmem:[%s1774 + $0x18] sm:$0xff]
        %s1779 = scalar_lea.vmem %s2, 10
        %v1780 = vld [vmem:[%s1779] sm:$0x1]
        %v1782 = vlaneseq
        %v1783 = vshrl.u32 %v1782, 7
        %v1784 = vsub.s32 0, %v1783
        %v1785 = vrot.slane %v1780, %v1784
        %1787 = vmatprep.subr.mxu0 0.0
        %1788 = vmatpush1.msra.mxu0 %v1775
        %1789 = vmatprep.subr.mxu0 0.0
        %1790 = vmatpush1.msra.mxu0 %v1776
        %1791 = vmatprep.subr.mxu0 0.0
        %1792 = vmatpush1.msra.mxu0 %v1777
        %1793 = vmatprep.subr.mxu0 0.0
        %1794 = vmatpush1.msra.mxu0 %v1778
        %1795 = vmatprep.subr.mxu0 0.0
        %1796 = vmatpush1.msra.mxu0 0.0
        %1797 = vmatprep.subr.mxu0 0.0
        %1798 = vmatpush1.msra.mxu0 0.0
        %1799 = vmatprep.subr.mxu0 0.0
        %1800 = vmatpush1.msra.mxu0 0.0
        %1801 = vmatprep.subr.mxu0 0.0
        %1802 = vmatpush1.msra.mxu0 0.0
        %1803 = vmatprep.subr.mxu0 0.0
        %1804 = vmatpush1.msra.mxu0 0.0
        %1805 = vmatprep.subr.mxu0 0.0
        %1806 = vmatpush1.msra.mxu0 0.0
        %1807 = vmatprep.subr.mxu0 0.0
        %1808 = vmatpush1.msra.mxu0 0.0
        %1809 = vmatprep.subr.mxu0 0.0
        %1810 = vmatpush1.msra.mxu0 0.0
        %1811 = vmatprep.subr.mxu0 0.0
        %1812 = vmatpush1.msra.mxu0 0.0
        %1813 = vmatprep.subr.mxu0 0.0
        %1814 = vmatpush1.msra.mxu0 0.0
        %1815 = vmatprep.subr.mxu0 0.0
        %1816 = vmatpush1.msra.mxu0 0.0
        %1817 = vmatprep.subr.mxu0 0.0
        %1818 = vmatpush1.msra.mxu0 0.0
        %1819 = vmatprep.subr.mxu0 0.0
        %1820 = vmatpush1.msra.mxu0 0.0
        %1821 = vmatprep.subr.mxu0 0.0
        %1822 = vmatpush1.msra.mxu0 0.0
        %1823 = vmatprep.subr.mxu0 0.0
        %1824 = vmatpush1.msra.mxu0 0.0
        %1825 = vmatprep.subr.mxu0 0.0
        %1826 = vmatpush1.msra.mxu0 0.0
        %1827 = vmatprep.subr.mxu0 0.0
        %1828 = vmatpush1.msra.mxu0 0.0
        %1829 = vmatprep.subr.mxu0 0.0
        %1830 = vmatpush1.msra.mxu0 0.0
        %1831 = vmatprep.subr.mxu0 0.0
        %1832 = vmatpush1.msra.mxu0 0.0
        %1833 = vmatprep.subr.mxu0 0.0
        %1834 = vmatpush1.msra.mxu0 0.0
        %1835 = vmatprep.subr.mxu0 0.0
        %1836 = vmatpush1.msra.mxu0 0.0
        %1837 = vmatprep.subr.mxu0 0.0
        %1838 = vmatpush1.msra.mxu0 0.0
        %1839 = vmatprep.subr.mxu0 0.0
        %1840 = vmatpush1.msra.mxu0 0.0
        %1841 = vmatprep.subr.mxu0 0.0
        %1842 = vmatpush1.msra.mxu0 0.0
        %1843 = vmatprep.subr.mxu0 0.0
        %1844 = vmatpush1.msra.mxu0 0.0
        %1845 = vmatprep.subr.mxu0 0.0
        %1846 = vmatpush1.msra.mxu0 0.0
        %1847 = vmatprep.subr.mxu0 0.0
        %1848 = vmatpush1.msra.mxu0 0.0
        %1849 = vmatprep.subr.mxu0 0.0
        %1850 = vmatpush1.msra.mxu0 0.0
        %1851 = vmatprep.mubr.f32.mxu0 0.0
        %1852 = vmatmul.mubr.f32.gmra.mrb[0].mxu0 %v247
        %v1853 = vpop.f32.mrb[0].mxu0
        %v1854 = vadd.f32 %v1785, %v1853
        %v1855 = vpop.f32.mrb[0].mxu0
        %1856 = vdwg.mxu0
        %s1857 = scalar_lea.vmem %s1, 352
        %v1858 = vld [vmem:[%s1857] sm:$0xff]
        %v1859 = vld [vmem:[%s1857 + $0x8] sm:$0xff]
        %v1860 = vld [vmem:[%s1857 + $0x10] sm:$0xff]
        %v1861 = vld [vmem:[%s1857 + $0x18] sm:$0xff]
        %s1862 = scalar_lea.vmem %s2, 11
        %v1863 = vld [vmem:[%s1862] sm:$0x1]
        %v1865 = vlaneseq
        %v1866 = vshrl.u32 %v1865, 7
        %v1867 = vsub.s32 0, %v1866
        %v1868 = vrot.slane %v1863, %v1867
        %1870 = vmatprep.subr.mxu0 0.0
        %1871 = vmatpush1.msra.mxu0 %v1858
        %1872 = vmatprep.subr.mxu0 0.0
        %1873 = vmatpush1.msra.mxu0 %v1859
        %1874 = vmatprep.subr.mxu0 0.0
        %1875 = vmatpush1.msra.mxu0 %v1860
        %1876 = vmatprep.subr.mxu0 0.0
        %1877 = vmatpush1.msra.mxu0 %v1861
        %1878 = vmatprep.subr.mxu0 0.0
        %1879 = vmatpush1.msra.mxu0 0.0
        %1880 = vmatprep.subr.mxu0 0.0
        %1881 = vmatpush1.msra.mxu0 0.0
        %1882 = vmatprep.subr.mxu0 0.0
        %1883 = vmatpush1.msra.mxu0 0.0
        %1884 = vmatprep.subr.mxu0 0.0
        %1885 = vmatpush1.msra.mxu0 0.0
        %1886 = vmatprep.subr.mxu0 0.0
        %1887 = vmatpush1.msra.mxu0 0.0
        %1888 = vmatprep.subr.mxu0 0.0
        %1889 = vmatpush1.msra.mxu0 0.0
        %1890 = vmatprep.subr.mxu0 0.0
        %1891 = vmatpush1.msra.mxu0 0.0
        %1892 = vmatprep.subr.mxu0 0.0
        %1893 = vmatpush1.msra.mxu0 0.0
        %1894 = vmatprep.subr.mxu0 0.0
        %1895 = vmatpush1.msra.mxu0 0.0
        %1896 = vmatprep.subr.mxu0 0.0
        %1897 = vmatpush1.msra.mxu0 0.0
        %1898 = vmatprep.subr.mxu0 0.0
        %1899 = vmatpush1.msra.mxu0 0.0
        %1900 = vmatprep.subr.mxu0 0.0
        %1901 = vmatpush1.msra.mxu0 0.0
        %1902 = vmatprep.subr.mxu0 0.0
        %1903 = vmatpush1.msra.mxu0 0.0
        %1904 = vmatprep.subr.mxu0 0.0
        %1905 = vmatpush1.msra.mxu0 0.0
        %1906 = vmatprep.subr.mxu0 0.0
        %1907 = vmatpush1.msra.mxu0 0.0
        %1908 = vmatprep.subr.mxu0 0.0
        %1909 = vmatpush1.msra.mxu0 0.0
        %1910 = vmatprep.subr.mxu0 0.0
        %1911 = vmatpush1.msra.mxu0 0.0
        %1912 = vmatprep.subr.mxu0 0.0
        %1913 = vmatpush1.msra.mxu0 0.0
        %1914 = vmatprep.subr.mxu0 0.0
        %1915 = vmatpush1.msra.mxu0 0.0
        %1916 = vmatprep.subr.mxu0 0.0
        %1917 = vmatpush1.msra.mxu0 0.0
        %1918 = vmatprep.subr.mxu0 0.0
        %1919 = vmatpush1.msra.mxu0 0.0
        %1920 = vmatprep.subr.mxu0 0.0
        %1921 = vmatpush1.msra.mxu0 0.0
        %1922 = vmatprep.subr.mxu0 0.0
        %1923 = vmatpush1.msra.mxu0 0.0
        %1924 = vmatprep.subr.mxu0 0.0
        %1925 = vmatpush1.msra.mxu0 0.0
        %1926 = vmatprep.subr.mxu0 0.0
        %1927 = vmatpush1.msra.mxu0 0.0
        %1928 = vmatprep.subr.mxu0 0.0
        %1929 = vmatpush1.msra.mxu0 0.0
        %1930 = vmatprep.subr.mxu0 0.0
        %1931 = vmatpush1.msra.mxu0 0.0
        %1932 = vmatprep.subr.mxu0 0.0
        %1933 = vmatpush1.msra.mxu0 0.0
        %1934 = vmatprep.mubr.f32.mxu0 0.0
        %1935 = vmatmul.mubr.f32.gmra.mrb[0].mxu0 %v247
        %v1936 = vpop.f32.mrb[0].mxu0
        %v1937 = vadd.f32 %v1868, %v1936
        %v1938 = vpop.f32.mrb[0].mxu0
        %1939 = vdwg.mxu0
        %v1941 = vsel %vm485, %v1771, 0
        %v1944 = vsel %vm485, %v1854, 0
        %1946 = vmatprep.subr.mxu0 0.0
        %1947 = vmatpush1.xpose.msra.mxu0 %v1944
        %1948 = vmatprep.subr.mxu0 0.0
        %1949 = vmatpush1.xpose.msra.mxu0 0.0
        %1950 = vmatprep.subr.mxu0 0.0
        %1951 = vmatpush1.xpose.msra.mxu0 0.0
        %1952 = vmatprep.subr.mxu0 0.0
        %1953 = vmatpush1.xpose.msra.mxu0 0.0
        %1954 = vmatprep.subr.mxu0 0.0
        %1955 = vmatpush1.xpose.msra.mxu0 0.0
        %1956 = vmatprep.subr.mxu0 0.0
        %1957 = vmatpush1.xpose.msra.mxu0 0.0
        %1958 = vmatprep.subr.mxu0 0.0
        %1959 = vmatpush1.xpose.msra.mxu0 0.0
        %1960 = vmatprep.subr.mxu0 0.0
        %1961 = vmatpush1.xpose.msra.mxu0 0.0
        %1962 = vmatprep.subr.mxu0 0.0
        %1963 = vmatpush1.xpose.msra.mxu0 0.0
        %1964 = vmatprep.subr.mxu0 0.0
        %1965 = vmatpush1.xpose.msra.mxu0 0.0
        %1966 = vmatprep.subr.mxu0 0.0
        %1967 = vmatpush1.xpose.msra.mxu0 0.0
        %1968 = vmatprep.subr.mxu0 0.0
        %1969 = vmatpush1.xpose.msra.mxu0 0.0
        %1970 = vmatprep.subr.mxu0 0.0
        %1971 = vmatpush1.xpose.msra.mxu0 0.0
        %1972 = vmatprep.subr.mxu0 0.0
        %1973 = vmatpush1.xpose.msra.mxu0 0.0
        %1974 = vmatprep.subr.mxu0 0.0
        %1975 = vmatpush1.xpose.msra.mxu0 0.0
        %1976 = vmatprep.subr.mxu0 0.0
        %1977 = vmatpush1.xpose.msra.mxu0 0.0
        %1978 = vmatprep.subr.mxu0 0.0
        %1979 = vmatpush1.xpose.msra.mxu0 0.0
        %1980 = vmatprep.subr.mxu0 0.0
        %1981 = vmatpush1.xpose.msra.mxu0 0.0
        %1982 = vmatprep.subr.mxu0 0.0
        %1983 = vmatpush1.xpose.msra.mxu0 0.0
        %1984 = vmatprep.subr.mxu0 0.0
        %1985 = vmatpush1.xpose.msra.mxu0 0.0
        %1986 = vmatprep.subr.mxu0 0.0
        %1987 = vmatpush1.xpose.msra.mxu0 0.0
        %1988 = vmatprep.subr.mxu0 0.0
        %1989 = vmatpush1.xpose.msra.mxu0 0.0
        %1990 = vmatprep.subr.mxu0 0.0
        %1991 = vmatpush1.xpose.msra.mxu0 0.0
        %1992 = vmatprep.subr.mxu0 0.0
        %1993 = vmatpush1.xpose.msra.mxu0 0.0
        %1994 = vmatprep.subr.mxu0 0.0
        %1995 = vmatpush1.xpose.msra.mxu0 0.0
        %1996 = vmatprep.subr.mxu0 0.0
        %1997 = vmatpush1.xpose.msra.mxu0 0.0
        %1998 = vmatprep.subr.mxu0 0.0
        %1999 = vmatpush1.xpose.msra.mxu0 0.0
        %2000 = vmatprep.subr.mxu0 0.0
        %2001 = vmatpush1.xpose.msra.mxu0 0.0
        %2002 = vmatprep.subr.mxu0 0.0
        %2003 = vmatpush1.xpose.msra.mxu0 0.0
        %2004 = vmatprep.subr.mxu0 0.0
        %2005 = vmatpush1.xpose.msra.mxu0 0.0
        %2006 = vmatprep.subr.mxu0 0.0
        %2007 = vmatpush1.xpose.msra.mxu0 0.0
        %2008 = vmatprep.subr.mxu0 0.0
        %2009 = vmatpush1.xpose.msra.mxu0 0.0
        %2010 = vmatprep.mubr.f32.mxu0 0.0
        %2011 = vmatmul.mubr.f32.gmra.mrb[0].mxu0 %v1941
        %v2012 = vpop.f32.mrb[0].mxu0
        %v2013 = vadd.f32 %v226, %v2012
        %v2014 = vpop.f32.mrb[0].mxu0
        %2015 = vdwg.mxu0
        %v2016 = vsel %vm485, %v2013, -inf
        %2017 = vmax.xlane.f32.xlu0 %v2016
        %v2018 = vpop.xlane.xlu0 %2017
        %v2019 = vsub.f32 %v2013, %v2018
        %v2020 = vmul.f32 %v2019, 1.442695
        %v2021 = vpow.pop %v2020
        %v2022 = vsel %vm485, %v2021, 0.0
        %2023 = vadd.xlane.f32.xlu0 %v2022
        %v2024 = vpop.xlane.xlu0 %2023
        %v2025 = vrcp.pop %v2024
        %v2026 = vmul.f32 %v2021, %v2025
        %v2028 = vsel %vm485, %v2026, 0
        %2030 = vmatprep.subr.mxu0 0.0
        %2031 = vmatpush1.msra.mxu0 %v1937
        %2032 = vmatprep.subr.mxu0 0.0
        %2033 = vmatpush1.msra.mxu0 0.0
        %2034 = vmatprep.subr.mxu0 0.0
        %2035 = vmatpush1.msra.mxu0 0.0
        %2036 = vmatprep.subr.mxu0 0.0
        %2037 = vmatpush1.msra.mxu0 0.0
        %2038 = vmatprep.subr.mxu0 0.0
        %2039 = vmatpush1.msra.mxu0 0.0
        %2040 = vmatprep.subr.mxu0 0.0
        %2041 = vmatpush1.msra.mxu0 0.0
        %2042 = vmatprep.subr.mxu0 0.0
        %2043 = vmatpush1.msra.mxu0 0.0
        %2044 = vmatprep.subr.mxu0 0.0
        %2045 = vmatpush1.msra.mxu0 0.0
        %2046 = vmatprep.subr.mxu0 0.0
        %2047 = vmatpush1.msra.mxu0 0.0
        %2048 = vmatprep.subr.mxu0 0.0
        %2049 = vmatpush1.msra.mxu0 0.0
        %2050 = vmatprep.subr.mxu0 0.0
        %2051 = vmatpush1.msra.mxu0 0.0
        %2052 = vmatprep.subr.mxu0 0.0
        %2053 = vmatpush1.msra.mxu0 0.0
        %2054 = vmatprep.subr.mxu0 0.0
        %2055 = vmatpush1.msra.mxu0 0.0
        %2056 = vmatprep.subr.mxu0 0.0
        %2057 = vmatpush1.msra.mxu0 0.0
        %2058 = vmatprep.subr.mxu0 0.0
        %2059 = vmatpush1.msra.mxu0 0.0
        %2060 = vmatprep.subr.mxu0 0.0
        %2061 = vmatpush1.msra.mxu0 0.0
        %2062 = vmatprep.subr.mxu0 0.0
        %2063 = vmatpush1.msra.mxu0 0.0
        %2064 = vmatprep.subr.mxu0 0.0
        %2065 = vmatpush1.msra.mxu0 0.0
        %2066 = vmatprep.subr.mxu0 0.0
        %2067 = vmatpush1.msra.mxu0 0.0
        %2068 = vmatprep.subr.mxu0 0.0
        %2069 = vmatpush1.msra.mxu0 0.0
        %2070 = vmatprep.subr.mxu0 0.0
        %2071 = vmatpush1.msra.mxu0 0.0
        %2072 = vmatprep.subr.mxu0 0.0
        %2073 = vmatpush1.msra.mxu0 0.0
        %2074 = vmatprep.subr.mxu0 0.0
        %2075 = vmatpush1.msra.mxu0 0.0
        %2076 = vmatprep.subr.mxu0 0.0
        %2077 = vmatpush1.msra.mxu0 0.0
        %2078 = vmatprep.subr.mxu0 0.0
        %2079 = vmatpush1.msra.mxu0 0.0
        %2080 = vmatprep.subr.mxu0 0.0
        %2081 = vmatpush1.msra.mxu0 0.0
        %2082 = vmatprep.subr.mxu0 0.0
        %2083 = vmatpush1.msra.mxu0 0.0
        %2084 = vmatprep.subr.mxu0 0.0
        %2085 = vmatpush1.msra.mxu0 0.0
        %2086 = vmatprep.subr.mxu0 0.0
        %2087 = vmatpush1.msra.mxu0 0.0
        %2088 = vmatprep.subr.mxu0 0.0
        %2089 = vmatpush1.msra.mxu0 0.0
        %2090 = vmatprep.subr.mxu0 0.0
        %2091 = vmatpush1.msra.mxu0 0.0
        %2092 = vmatprep.subr.mxu0 0.0
        %2093 = vmatpush1.msra.mxu0 0.0
        %2094 = vmatprep.mubr.f32.mxu0 0.0
        %2095 = vmatmul.mubr.f32.gmra.mrb[0].mxu0 %v2028
        %v2096 = vpop.f32.mrb[0].mxu0
        %v2097 = vadd.f32 0.0, %v2096
        %v2098 = vpop.f32.mrb[0].mxu0
        %2099 = vdwg.mxu0
        %s2100 = scalar_lea.vmem %s3, 24
        %v2101 = vld [vmem:[%s2100] sm:$0xff]
        %v2103 = vsel %vm485, %v2097, 0
        %2105 = vmatprep.subr.mxu0 0.0
        %2106 = vmatpush1.msra.mxu0 %v2101
        %2107 = vmatprep.subr.mxu0 0.0
        %2108 = vmatpush1.msra.mxu0 0.0
        %2109 = vmatprep.subr.mxu0 0.0
        %2110 = vmatpush1.msra.mxu0 0.0
        %2111 = vmatprep.subr.mxu0 0.0
        %2112 = vmatpush1.msra.mxu0 0.0
        %2113 = vmatprep.subr.mxu0 0.0
        %2114 = vmatpush1.msra.mxu0 0.0
        %2115 = vmatprep.subr.mxu0 0.0
        %2116 = vmatpush1.msra.mxu0 0.0
        %2117 = vmatprep.subr.mxu0 0.0
        %2118 = vmatpush1.msra.mxu0 0.0
        %2119 = vmatprep.subr.mxu0 0.0
        %2120 = vmatpush1.msra.mxu0 0.0
        %2121 = vmatprep.subr.mxu0 0.0
        %2122 = vmatpush1.msra.mxu0 0.0
        %2123 = vmatprep.subr.mxu0 0.0
        %2124 = vmatpush1.msra.mxu0 0.0
        %2125 = vmatprep.subr.mxu0 0.0
        %2126 = vmatpush1.msra.mxu0 0.0
        %2127 = vmatprep.subr.mxu0 0.0
        %2128 = vmatpush1.msra.mxu0 0.0
        %2129 = vmatprep.subr.mxu0 0.0
        %2130 = vmatpush1.msra.mxu0 0.0
        %2131 = vmatprep.subr.mxu0 0.0
        %2132 = vmatpush1.msra.mxu0 0.0
        %2133 = vmatprep.subr.mxu0 0.0
        %2134 = vmatpush1.msra.mxu0 0.0
        %2135 = vmatprep.subr.mxu0 0.0
        %2136 = vmatpush1.msra.mxu0 0.0
        %2137 = vmatprep.subr.mxu0 0.0
        %2138 = vmatpush1.msra.mxu0 0.0
        %2139 = vmatprep.subr.mxu0 0.0
        %2140 = vmatpush1.msra.mxu0 0.0
        %2141 = vmatprep.subr.mxu0 0.0
        %2142 = vmatpush1.msra.mxu0 0.0
        %2143 = vmatprep.subr.mxu0 0.0
        %2144 = vmatpush1.msra.mxu0 0.0
        %2145 = vmatprep.subr.mxu0 0.0
        %2146 = vmatpush1.msra.mxu0 0.0
        %2147 = vmatprep.subr.mxu0 0.0
        %2148 = vmatpush1.msra.mxu0 0.0
        %2149 = vmatprep.subr.mxu0 0.0
        %2150 = vmatpush1.msra.mxu0 0.0
        %2151 = vmatprep.subr.mxu0 0.0
        %2152 = vmatpush1.msra.mxu0 0.0
        %2153 = vmatprep.subr.mxu0 0.0
        %2154 = vmatpush1.msra.mxu0 0.0
        %2155 = vmatprep.subr.mxu0 0.0
        %2156 = vmatpush1.msra.mxu0 0.0
        %2157 = vmatprep.subr.mxu0 0.0
        %2158 = vmatpush1.msra.mxu0 0.0
        %2159 = vmatprep.subr.mxu0 0.0
        %2160 = vmatpush1.msra.mxu0 0.0
        %2161 = vmatprep.subr.mxu0 0.0
        %2162 = vmatpush1.msra.mxu0 0.0
        %2163 = vmatprep.subr.mxu0 0.0
        %2164 = vmatpush1.msra.mxu0 0.0
        %2165 = vmatprep.subr.mxu0 0.0
        %2166 = vmatpush1.msra.mxu0 0.0
        %2167 = vmatprep.subr.mxu0 0.0
        %2168 = vmatpush1.msra.mxu0 0.0
        %2169 = vmatprep.mubr.f32.mxu0 0.0
        %2170 = vmatmul.mubr.f32.gmra.mrb[0].mxu0 %v2103
        %v2171 = vpop.f32.mrb[0].mxu0
        %v2172 = vadd.f32 0.0, %v2171
        %v2173 = vpop.f32.mrb[0].mxu0
        %2174 = vdwg.mxu0
        %v2175 = vadd.f32 %v1690, %v2172
        %2176 = vst.msk [vmem:[%s215] sm:$0xff] %vm245, %v2175
        %s2177 = sand.u32 %s137, 1
        %s2178 = scalar_lea.sflag [#allocation3], %s2177
        %s2179 = sand.u32 %s137, 1
        %s2180 = smul.addr %s2179, 8
        %s2181 = scalar_lea.vmem [#allocation2], %s2180
        // Predicated region
        $region41: #{tpu_custom_call.1} parent=39 // pred_check
          %p2182 = pneg %p147
        $region42: #{tpu_custom_call.1} parent=39 // pred_check_branch
          %2184 = sbr.rel (%p2182) target = $region44
        $region43: #{tpu_custom_call.1} parent=39 // pred_region
          %s2186 = ssub.s32 128, 128
          %2187 = vsyncadd %s2178, %s2186
          %s2188 = smul.addr %s19, 128
          %s2189 = scalar_lea.hbm %s5, %s2188
          %s2191 = sshll.u32 %s2181, 4
          %s2192 = int_to_ptr.vmem [resolvable:$true] %s2191
          %2194 = dma.vmem_to_hbm [thread:$0]  %s2192, 128, %s2189, %s2178
        $region44: #{tpu_custom_call.1} parent=39 // pred_fallthru
          _
      $region40: #{tpu_custom_call.1} parent=5 // pred_fallthru
        _
      %p2195 = scmp.le.s32.totalorder 2, %s14
      // Predicated region
      $region45: #{tpu_custom_call.1} parent=5 // pred_check
        %p2196 = pneg %p2195
      $region46: #{tpu_custom_call.1} parent=5 // pred_check_branch
        %2198 = sbr.rel (%p2196) target = $region48
      $region47: #{tpu_custom_call.1} parent=5 // pred_region
        %s2199 = ssub.s32 %s14, 2
        // Predicated region
        $region49: #{tpu_custom_call.1} parent=47 // pred_check
          %p2200 = pneg %p153
        $region50: #{tpu_custom_call.1} parent=47 // pred_check_branch
          %2202 = sbr.rel (%p2200) target = $region52
        $region51: #{tpu_custom_call.1} parent=47 // pred_region
          %s2203 = sand.u32 %s138, 1
          %s2204 = scalar_lea.sflag [#allocation3], %s2203
          %s2205 = sand.u32 %s138, 1
          %s2206 = smul.addr %s2205, 8
          %s2207 = scalar_lea.vmem [#allocation2], %s2206
          %2208 = dma.done %s2204, 128
        $region52: #{tpu_custom_call.1} parent=47 // pred_fallthru
          _
      $region48: #{tpu_custom_call.1} parent=5 // pred_fallthru
        _
    $region6: #{tpu_custom_call.1} parent=1 // loop_footer
      %s18 = sadd.s32 1, %s14
    $region7: #{tpu_custom_call.1} parent=1 // loop_footer_branch
      %13 = sbr.rel target = $region3
    $region8: #{tpu_custom_call.1} parent=1 // loop_exit
      _
    %2209 = vsyncpa [#allocation3], 1
    %s2210 = scalar_lea.sflag [#allocation3], 1
    %2211 = vsyncpa %s2210, 1

</llo_original>
